<compile_context>
chip_gen: v7x
topology: tpu7x:2x2x1
jax: 0.10.0
libtpu: 0.0.40
codegen_flags: <defaults>
</compile_context>

<pallas_src>
import functools

import jax
import jax.numpy as jnp
from jax.experimental import pallas as pl
from jax.experimental.pallas import tpu as pltpu

EPS = 1e-5          # torch.nn.InstanceNorm1d default eps
NEG_SLOPE = 0.2     # LeakyReLU(0.2)
H1, H2 = 128, 64    # hidden widths of the discriminator
HP = jax.lax.Precision.HIGHEST   # keep f32 matmul accuracy (matmuls not the bottleneck)


def _col_instance_norm(h):
    # Features on axis 0 (sublanes); each column is one (b, s) row.
    # One-pass fused stats: biased var = E[h^2] - mean^2 (matches InstanceNorm1d).
    inv_n = 1.0 / h.shape[0]
    mean = jnp.sum(h, axis=0, keepdims=True) * inv_n
    ex2 = jnp.sum(h * h, axis=0, keepdims=True) * inv_n
    var = jnp.maximum(ex2 - mean * mean, 0.0)
    return (h - mean) * jax.lax.rsqrt(var + EPS)


def _leaky_relu(h):
    # 2 VALU ops (mul + max), no select mask materialized.
    return jnp.maximum(h, NEG_SLOPE * h)


def discriminator_kernel(x_ref, w1T_ref, b1_ref, w2T_ref, b2_ref, w3_ref,
                         b3_ref, o_ref, *, n_valid, tile_rows):
    x = x_ref[...]                                            # (tile_rows, D), natural layout

    if n_valid is not None:
        # Ragged tail: zero out padded / uninitialized rows so nothing
        # non-finite ever flows through the pipeline (columns are independent,
        # the corresponding outputs are sliced off in the wrapper).
        base = pl.program_id(0) * tile_rows
        rows = base + jax.lax.broadcasted_iota(jnp.int32, (tile_rows, 1), 0)
        x = jnp.where(rows < n_valid, x, 0.0)

    # Linear(D, 128): (128, D) contracted with (tile_rows, D) on the minor dim
    # -> lane-dense (128, tile_rows); transpose is absorbed into the MXU op.
    h = jax.lax.dot_general(
        w1T_ref[...], x,
        dimension_numbers=(((1,), (1,)), ((), ())),
        preferred_element_type=jnp.float32,
        precision=HP) + b1_ref[...]
    h = _leaky_relu(_col_instance_norm(h))        # InstanceNorm + LeakyReLU (+Dropout=id)

    # Linear(128, 64)
    h = jnp.dot(w2T_ref[...], h,
                preferred_element_type=jnp.float32,
                precision=HP) + b2_ref[...]                    # (64, tile_rows)
    h = _leaky_relu(_col_instance_norm(h))

    # Linear(64, 1) + Sigmoid: VPU multiply + sublane reduce, scalar bias (SMEM)
    logits = jnp.sum(h * w3_ref[...], axis=0, keepdims=True) + b3_ref[0]
    o_ref[...] = jax.nn.sigmoid(logits)                        # lane-dense (1, tile_rows)


def init_params(key, input_dim):
    """Deterministic params mimicking torch.nn.Linear default init."""
    def linear(key, fan_in, fan_out):
        kw, kb = jax.random.split(key)
        bound = 1.0 / jnp.sqrt(jnp.float32(fan_in))
        w = jax.random.uniform(kw, (fan_in, fan_out), jnp.float32, -bound, bound)
        b = jax.random.uniform(kb, (fan_out,), jnp.float32, -bound, bound)
        return w, b

    k1, k2, k3 = jax.random.split(key, 3)
    w1, b1 = linear(k1, input_dim, H1)
    w2, b2 = linear(k2, H1, H2)
    w3, b3 = linear(k3, H2, 1)
    return dict(w1=w1, b1=b1, w2=w2, b2=b2, w3=w3, b3=b3)


@functools.partial(jax.jit, static_argnames=("tile_rows",))
def discriminator_forward(x, params, *, tile_rows=None):
    """x: (B, S, input_dim) float32 -> (B, S, 1) sigmoid probabilities."""
    B, S, D = x.shape
    n_rows = B * S
    n_rows8 = ((n_rows + 7) // 8) * 8           # sublane granule

    x2d = x.reshape(n_rows, D)                   # free reshape, no transpose
    if n_rows8 != n_rows:
        # Tiny tail pad (< 8 rows) so every block's second-minor dim is 8-aligned.
        x2d = jnp.pad(x2d, ((0, n_rows8 - n_rows), (0, 0)))

    if tile_rows is None:
        # Big tiles amortize the ~0.35us/step pipeline overhead; cap at 4096
        # (~10 MiB/tile incl. intermediates -> fits v5e/v6e/v7x scoped VMEM);
        # aim for >= 2 grid steps so v7x can megacore-shard the parallel axis.
        half = -(-n_rows8 // 2)
        tile_rows = max(128, min(4096, ((half + 127) // 128) * 128))
    else:
        assert tile_rows % 128 == 0, "tile_rows must be a multiple of 128"
    tile_rows = min(tile_rows, n_rows8)          # never exceed the (padded) row count

    n_tiles = -(-n_rows8 // tile_rows)
    n_pad = n_tiles * tile_rows
    n_valid = n_rows if n_pad != n_rows else None

    w1T = params["w1"].T                         # (128, D)
    b1 = params["b1"].reshape(H1, 1)
    w2T = params["w2"].T                         # (64, 128)
    b2 = params["b2"].reshape(H2, 1)
    w3 = params["w3"].reshape(H2, 1)             # (64, 1)
    b3 = params["b3"].reshape(1)                 # scalar, lives in SMEM

    full = lambda i: (0, 0)                      # weights/biases: resident block

    kernel = functools.partial(discriminator_kernel,
                               n_valid=n_valid, tile_rows=tile_rows)

    out = pl.pallas_call(
        kernel,
        out_shape=jax.ShapeDtypeStruct((1, n_pad), jnp.float32),
        grid_spec=pltpu.PrefetchScalarGridSpec(
            num_scalar_prefetch=0,
            grid=(n_tiles,),
            in_specs=[
                pl.BlockSpec((tile_rows, D), lambda i: (i, 0)),       # x tile (natural)
                pl.BlockSpec((H1, D), full),                          # w1^T
                pl.BlockSpec((H1, 1), full),                          # b1
                pl.BlockSpec((H2, H1), full),                         # w2^T
                pl.BlockSpec((H2, 1), full),                          # b2
                pl.BlockSpec((H2, 1), full),                          # w3
                pl.BlockSpec(memory_space=pltpu.MemorySpace.SMEM),    # b3 scalar
            ],
            out_specs=pl.BlockSpec((1, tile_rows), lambda i: (0, i)),  # lane-dense
        ),
        compiler_params=pltpu.CompilerParams(
            dimension_semantics=("parallel",),
            vmem_limit_bytes=32 * 1024 * 1024),
    )(x2d, w1T, b1, w2T, b2, w3, b3)

    return out[0, :n_rows].reshape(B, S, 1)


def reference_forward(x, params):
    """Pure-JAX reference of the same forward (eval-mode dropout, two-pass norm)."""
    def norm_act(h):
        mean = jnp.mean(h, axis=-1, keepdims=True)
        var = jnp.mean((h - mean) ** 2, axis=-1, keepdims=True)
        h = (h - mean) * jax.lax.rsqrt(var + EPS)
        return jnp.maximum(h, NEG_SLOPE * h)

    h = jnp.dot(x, params["w1"], precision=HP) + params["b1"]
    h = norm_act(h)
    h = jnp.dot(h, params["w2"], precision=HP) + params["b2"]
    h = norm_act(h)
    return jax.nn.sigmoid(jnp.dot(h, params["w3"], precision=HP) + params["b3"])


if __name__ == "__main__":
    key = jax.random.PRNGKey(0)
    k_x1, k_x2, k_p = jax.random.split(key, 3)

    INPUT_DIM = 16
    params = init_params(k_p, INPUT_DIM)

    # Case 1: tiny shape -> single exact tile (16 rows).
    B1, S1 = 2, 8
    x1 = jax.random.normal(k_x1, (B1, S1, INPUT_DIM), dtype=jnp.float32)
    out1 = jax.block_until_ready(discriminator_forward(x1, params))
    ref1 = reference_forward(x1, params)
    assert out1.shape == (B1, S1, 1)
    assert bool(jnp.allclose(out1, ref1, atol=1e-3, rtol=1e-3)), "mismatch (case 1)"

    # Case 2: ragged row count, auto tile -> 2 tiles of 256 rows with masked tail.
    B2, S2 = 3, 100                      # 300 rows
    x2 = jax.random.normal(k_x2, (B2, S2, INPUT_DIM), dtype=jnp.float32)
    out2 = jax.block_until_ready(discriminator_forward(x2, params))
    ref2 = reference_forward(x2, params)
    assert out2.shape == (B2, S2, 1)
    assert bool(jnp.allclose(out2, ref2, atol=1e-3, rtol=1e-3)), "mismatch (case 2)"

    # Case 3: explicit small tile -> 3-step grid, exercises pipelining + masking.
    out3 = jax.block_until_ready(discriminator_forward(x2, params, tile_rows=128))
    assert out3.shape == (B2, S2, 1)
    assert bool(jnp.allclose(out3, ref2, atol=1e-3, rtol=1e-3)), "mismatch (case 3)"

    print("KERNEL_OK")
</pallas_src>

<mosaic_0001>
module attributes {stable_mosaic.version = 11 : i64} {
  func.func @discriminator_kernel(%arg0: i32, %arg1: memref<16x16xf32, #tpu.memory_space<vmem>>, %arg2: memref<128x16xf32, #tpu.memory_space<vmem>>, %arg3: memref<128x1xf32, #tpu.memory_space<vmem>>, %arg4: memref<64x128xf32, #tpu.memory_space<vmem>>, %arg5: memref<64x1xf32, #tpu.memory_space<vmem>>, %arg6: memref<64x1xf32, #tpu.memory_space<vmem>>, %arg7: memref<1xf32, #tpu.memory_space<smem>>, %arg8: memref<1x16xf32, #tpu.memory_space<vmem>>) attributes {dimension_semantics = [#tpu.dimension_semantics<parallel>], iteration_bounds = array<i64: 1>, scalar_prefetch = 0 : i64, scratch_operands = 0 : i64, tpu.core_type = #tpu.core_type<tc>, window_params = [{transform_indices = @transform_0, window_bounds = array<i64: 16, 16>}, {pipeline_mode = #tpu.pipeline_mode<synchronous>, transform_indices = @transform_1, window_bounds = array<i64: 128, 16>}, {pipeline_mode = #tpu.pipeline_mode<synchronous>, transform_indices = @transform_2, window_bounds = array<i64: 128, 1>}, {pipeline_mode = #tpu.pipeline_mode<synchronous>, transform_indices = @transform_3, window_bounds = array<i64: 64, 128>}, {pipeline_mode = #tpu.pipeline_mode<synchronous>, transform_indices = @transform_4, window_bounds = array<i64: 64, 1>}, {pipeline_mode = #tpu.pipeline_mode<synchronous>, transform_indices = @transform_5, window_bounds = array<i64: 64, 1>}, {transform_indices = @transform_6, window_bounds = array<i64: 1>}, {transform_indices = @transform_7, window_bounds = array<i64: 1, 16>}]} {
    %c0 = arith.constant 0 : index
    %c0_0 = arith.constant 0 : index
    %0 = vector.load %arg1[%c0, %c0_0] : memref<16x16xf32, #tpu.memory_space<vmem>>, vector<16x16xf32>
    %c0_1 = arith.constant 0 : index
    %c0_2 = arith.constant 0 : index
    %1 = vector.load %arg2[%c0_1, %c0_2] : memref<128x16xf32, #tpu.memory_space<vmem>>, vector<128x16xf32>
    %cst = arith.constant dense<0.000000e+00> : vector<128x16xf32>
    %2 = tpu.matmul %1, %0, %cst {dimension_numbers = #tpu.dot_dimension_numbers<[1], [1], [0], [0], [0, 0, 1, 0], [], []>, precision = #tpu.contract_precision<fp32>} : vector<128x16xf32>, vector<16x16xf32>, vector<128x16xf32> -> vector<128x16xf32>
    %c0_3 = arith.constant 0 : index
    %c0_4 = arith.constant 0 : index
    %3 = vector.load %arg3[%c0_3, %c0_4] : memref<128x1xf32, #tpu.memory_space<vmem>>, vector<128x1xf32>
    %4 = vector.broadcast %3 : vector<128x1xf32> to vector<128x16xf32>
    %5 = arith.addf %2, %4 : vector<128x16xf32>
    %cst_5 = arith.constant dense<0.000000e+00> : vector<16xf32>
    %6 = vector.multi_reduction <add>, %5, %cst_5 [0] : vector<128x16xf32> to vector<16xf32>
    %7 = vector.shape_cast %6 : vector<16xf32> to vector<1x16xf32>
    %cst_6 = arith.constant 7.812500e-03 : f32
    %8 = vector.broadcast %cst_6 : f32 to vector<1x16xf32>
    %9 = arith.mulf %7, %8 : vector<1x16xf32>
    %10 = arith.mulf %5, %5 : vector<128x16xf32>
    %cst_7 = arith.constant dense<0.000000e+00> : vector<16xf32>
    %11 = vector.multi_reduction <add>, %10, %cst_7 [0] : vector<128x16xf32> to vector<16xf32>
    %12 = vector.shape_cast %11 : vector<16xf32> to vector<1x16xf32>
    %cst_8 = arith.constant 7.812500e-03 : f32
    %13 = vector.broadcast %cst_8 : f32 to vector<1x16xf32>
    %14 = arith.mulf %12, %13 : vector<1x16xf32>
    %15 = arith.mulf %9, %9 : vector<1x16xf32>
    %16 = arith.subf %14, %15 : vector<1x16xf32>
    %cst_9 = arith.constant 0.000000e+00 : f32
    %17 = vector.broadcast %cst_9 : f32 to vector<1x16xf32>
    %18 = arith.maximumf %16, %17 : vector<1x16xf32>
    %19 = vector.broadcast %9 : vector<1x16xf32> to vector<128x16xf32>
    %20 = arith.subf %5, %19 : vector<128x16xf32>
    %cst_10 = arith.constant 9.99999974E-6 : f32
    %21 = vector.broadcast %cst_10 : f32 to vector<1x16xf32>
    %22 = arith.addf %18, %21 : vector<1x16xf32>
    %23 = math.rsqrt %22 : vector<1x16xf32>
    %24 = vector.broadcast %23 : vector<1x16xf32> to vector<128x16xf32>
    %25 = arith.mulf %20, %24 : vector<128x16xf32>
    %cst_11 = arith.constant 2.000000e-01 : f32
    %26 = vector.broadcast %cst_11 : f32 to vector<128x16xf32>
    %27 = arith.mulf %26, %25 : vector<128x16xf32>
    %28 = arith.maximumf %25, %27 : vector<128x16xf32>
    %c0_12 = arith.constant 0 : index
    %c0_13 = arith.constant 0 : index
    %29 = vector.load %arg4[%c0_12, %c0_13] : memref<64x128xf32, #tpu.memory_space<vmem>>, vector<64x128xf32>
    %cst_14 = arith.constant dense<0.000000e+00> : vector<64x16xf32>
    %30 = tpu.matmul %29, %28, %cst_14 {dimension_numbers = #tpu.dot_dimension_numbers<[1], [0], [0], [1], [0, 0, 1, 1], [], []>, precision = #tpu.contract_precision<fp32>} : vector<64x128xf32>, vector<128x16xf32>, vector<64x16xf32> -> vector<64x16xf32>
    %c0_15 = arith.constant 0 : index
    %c0_16 = arith.constant 0 : index
    %31 = vector.load %arg5[%c0_15, %c0_16] : memref<64x1xf32, #tpu.memory_space<vmem>>, vector<64x1xf32>
    %32 = vector.broadcast %31 : vector<64x1xf32> to vector<64x16xf32>
    %33 = arith.addf %30, %32 : vector<64x16xf32>
    %cst_17 = arith.constant dense<0.000000e+00> : vector<16xf32>
    %34 = vector.multi_reduction <add>, %33, %cst_17 [0] : vector<64x16xf32> to vector<16xf32>
    %35 = vector.shape_cast %34 : vector<16xf32> to vector<1x16xf32>
    %cst_18 = arith.constant 1.562500e-02 : f32
    %36 = vector.broadcast %cst_18 : f32 to vector<1x16xf32>
    %37 = arith.mulf %35, %36 : vector<1x16xf32>
    %38 = arith.mulf %33, %33 : vector<64x16xf32>
    %cst_19 = arith.constant dense<0.000000e+00> : vector<16xf32>
    %39 = vector.multi_reduction <add>, %38, %cst_19 [0] : vector<64x16xf32> to vector<16xf32>
    %40 = vector.shape_cast %39 : vector<16xf32> to vector<1x16xf32>
    %cst_20 = arith.constant 1.562500e-02 : f32
    %41 = vector.broadcast %cst_20 : f32 to vector<1x16xf32>
    %42 = arith.mulf %40, %41 : vector<1x16xf32>
    %43 = arith.mulf %37, %37 : vector<1x16xf32>
    %44 = arith.subf %42, %43 : vector<1x16xf32>
    %cst_21 = arith.constant 0.000000e+00 : f32
    %45 = vector.broadcast %cst_21 : f32 to vector<1x16xf32>
    %46 = arith.maximumf %44, %45 : vector<1x16xf32>
    %47 = vector.broadcast %37 : vector<1x16xf32> to vector<64x16xf32>
    %48 = arith.subf %33, %47 : vector<64x16xf32>
    %cst_22 = arith.constant 9.99999974E-6 : f32
    %49 = vector.broadcast %cst_22 : f32 to vector<1x16xf32>
    %50 = arith.addf %46, %49 : vector<1x16xf32>
    %51 = math.rsqrt %50 : vector<1x16xf32>
    %52 = vector.broadcast %51 : vector<1x16xf32> to vector<64x16xf32>
    %53 = arith.mulf %48, %52 : vector<64x16xf32>
    %cst_23 = arith.constant 2.000000e-01 : f32
    %54 = vector.broadcast %cst_23 : f32 to vector<64x16xf32>
    %55 = arith.mulf %54, %53 : vector<64x16xf32>
    %56 = arith.maximumf %53, %55 : vector<64x16xf32>
    %c0_24 = arith.constant 0 : index
    %c0_25 = arith.constant 0 : index
    %57 = vector.load %arg6[%c0_24, %c0_25] : memref<64x1xf32, #tpu.memory_space<vmem>>, vector<64x1xf32>
    %58 = vector.broadcast %57 : vector<64x1xf32> to vector<64x16xf32>
    %59 = arith.mulf %56, %58 : vector<64x16xf32>
    %cst_26 = arith.constant dense<0.000000e+00> : vector<16xf32>
    %60 = vector.multi_reduction <add>, %59, %cst_26 [0] : vector<64x16xf32> to vector<16xf32>
    %61 = vector.shape_cast %60 : vector<16xf32> to vector<1x16xf32>
    %c0_27 = arith.constant 0 : index
    %62 = memref.load %arg7[%c0_27] : memref<1xf32, #tpu.memory_space<smem>>
    %63 = vector.broadcast %62 : f32 to vector<1x16xf32>
    %64 = arith.addf %61, %63 : vector<1x16xf32>
    %65 = arith.negf %64 : vector<1x16xf32>
    %66 = math.exp %65 : vector<1x16xf32>
    %cst_28 = arith.constant 1.000000e+00 : f32
    %67 = vector.broadcast %cst_28 : f32 to vector<1x16xf32>
    %68 = arith.addf %67, %66 : vector<1x16xf32>
    %69 = arith.divf %67, %68 : vector<1x16xf32>
    %c0_29 = arith.constant 0 : index
    %c0_30 = arith.constant 0 : index
    %70 = vector.load %arg8[%c0_29, %c0_30] : memref<1x16xf32, #tpu.memory_space<vmem>>, vector<1x16xf32>
    tpu.vector_store %arg8[%c0_29, %c0_30], %69 {strides = array<i32>} : memref<1x16xf32, #tpu.memory_space<vmem>>, vector<1x16xf32>,
    return
  }
  func.func @transform_0(%arg0: i32) -> (i32, i32) {
    %c0_i32 = arith.constant 0 : i32
    %c0_i32_0 = arith.constant 0 : i32
    return %arg0, %c0_i32 : i32, i32
  }
  func.func @transform_1(%arg0: i32) -> (i32, i32) {
    %c0_i32 = arith.constant 0 : i32
    %c0_i32_0 = arith.constant 0 : i32
    %c0_i32_1 = arith.constant 0 : i32
    return %c0_i32, %c0_i32_0 : i32, i32
  }
  func.func @transform_2(%arg0: i32) -> (i32, i32) {
    %c0_i32 = arith.constant 0 : i32
    %c0_i32_0 = arith.constant 0 : i32
    %c0_i32_1 = arith.constant 0 : i32
    return %c0_i32, %c0_i32_0 : i32, i32
  }
  func.func @transform_3(%arg0: i32) -> (i32, i32) {
    %c0_i32 = arith.constant 0 : i32
    %c0_i32_0 = arith.constant 0 : i32
    %c0_i32_1 = arith.constant 0 : i32
    return %c0_i32, %c0_i32_0 : i32, i32
  }
  func.func @transform_4(%arg0: i32) -> (i32, i32) {
    %c0_i32 = arith.constant 0 : i32
    %c0_i32_0 = arith.constant 0 : i32
    %c0_i32_1 = arith.constant 0 : i32
    return %c0_i32, %c0_i32_0 : i32, i32
  }
  func.func @transform_5(%arg0: i32) -> (i32, i32) {
    %c0_i32 = arith.constant 0 : i32
    %c0_i32_0 = arith.constant 0 : i32
    %c0_i32_1 = arith.constant 0 : i32
    return %c0_i32, %c0_i32_0 : i32, i32
  }
  func.func @transform_6(%arg0: i32) -> i32 {
    %c0_i32 = arith.constant 0 : i32
    %c0_i32_0 = arith.constant 0 : i32
    return %c0_i32 : i32
  }
  func.func @transform_7(%arg0: i32) -> (i32, i32) {
    %c0_i32 = arith.constant 0 : i32
    %c0_i32_0 = arith.constant 0 : i32
    return %c0_i32, %arg0 : i32, i32
  }
}

</mosaic_0001>

<llo_original>
// kernel: squeeze.1
$region0: #{squeeze.1}
  %s0 = inlined_call_operand.vmem [shape: f32[16], index: 0, kind: input, shape index: {}]
  %s1 = inlined_call_operand.hbm [shape: f32[2,8,1], index: 1, kind: output, shape index: {}]
  $region1: #{squeeze.1} parent=0
    #allocation0 [shape = 'u8[1024]{0}', space=vmem, size = 0x400, scoped, tag = 'operand span for operand 1']
    #allocation1 [shape = 's32[1]{0}', space=sflag, size = 0x4, scoped, tag = 'scoped memory for squeeze.1']
    #allocation2 [shape = 'u8[4096]{0}', space=vmem, size = 0x1000, scoped, tag = 'scoped mem for output reshape']
    #allocation3 [shape = 'u8[4096]{0}', space=vmem, size = 0x1000, scoped, tag = 'scoped mem for input reshape']
    %2 = vsyncpa [#allocation1], 0
    %s4 = sshllo.u32 0, 1
    %v5 = vld [vmem:[%s0] sm:%s4]
    %6 = vst [vmem:[#allocation3] sm:%s4] %v5
    %v7 = vld [vmem:[#allocation3] sm:$0x1]
    %vm8 = vcmask 64512
    %9 = vst.msk [vmem:[#allocation2] sm:$0x1] %vm8, %v7
    %v10 = vld [vmem:[#allocation3] sm:$0x1]
    %11 = vrot.lane.b32.xlu0 %v10, 120
    %v12 = vpop.permute.xlu0 %11
    %vm13 = vcmask 64512
    %s14 = scalar_lea.vmem [#allocation2], 1
    %15 = vst.msk [vmem:[%s14] sm:$0x1] %vm13, %v12
    %s17 = sshllo.u32 0, 2
    %v19 = vld [vmem:[#allocation2] sm:%s17]
    %s20 = sshllo.u32 0, 2
    %21 = vst [vmem:[#allocation0] sm:%s20] %v19
    %s23 = ssub.s32 32, 32
    %24 = vsyncadd [#allocation1], %s23
    %s26 = sshll.u32 [#allocation0], 4
    %s27 = int_to_ptr.vmem [resolvable:$true] %s26
    %29 = dma.vmem_to_hbm [thread:$0]  %s27, 32, %s1, [#allocation1]
    %30 = dma.done [#allocation1], 32
    %31 = vsyncpa [#allocation1], 1

// kernel: discriminator_forward.1
$region0: #{discriminator_forward.1}
  #allocation0 [shape = 'u32[]', space=smem, size = 0x4, offset = 0x4, fixed_abs, tag = 'smem constant byte address 0x4 - core index']
  #allocation1 [shape = 'u32[144,128]{1,0:T(1,128)}', space=vmem, size = 0x12000, scoped, tag = 'internal scratch']
  #allocation2 [shape = 'f32[1]{0:T(128)S(6)}', space=smem, size = 0x200, scoped, tag = 'scoped memory for discriminator_forward.1']
  %s0 = inlined_call_operand.vmem [shape: f32[16,16], index: 0, kind: input, shape index: {}]
  %s1 = inlined_call_operand.vmem [shape: f32[128,16], index: 1, kind: input, shape index: {}]
  %s2 = inlined_call_operand.vmem [shape: f32[128,1], index: 2, kind: input, shape index: {}]
  %s3 = inlined_call_operand.vmem [shape: f32[64,128], index: 3, kind: input, shape index: {}]
  %s4 = inlined_call_operand.vmem [shape: f32[64,1], index: 4, kind: input, shape index: {}]
  %s5 = inlined_call_operand.vmem [shape: f32[64,1], index: 5, kind: input, shape index: {}]
  %s6 = inlined_call_operand.<no memory space> [shape: f32[1], index: 6, kind: input, shape index: {}]
  %s7 = inlined_call_operand.vmem [shape: f32[1,16], index: 7, kind: output, shape index: {}]
  %s8 = sld [smem:[#allocation0]]
  $region38: #{discriminator_forward.1} parent=0
    _
  %s10 = ssub.s32 1, %s8
  %s11 = scalar_select 0, %s10, %s8
  %12 = sst [smem:[#allocation2]] %s6
  // Predicated region
  $region2: #{discriminator_forward.1} parent=0 // pred_check
    _
  $region3: #{discriminator_forward.1} parent=0 // pred_check_branch
    %14 = sbr.rel (0) target = $region5
  $region4: #{discriminator_forward.1} parent=0 // pred_region
    _
  $region5: #{discriminator_forward.1} parent=0 // pred_fallthru
    _
  // Predicated region
  $region6: #{discriminator_forward.1} parent=0 // pred_check
    _
  $region7: #{discriminator_forward.1} parent=0 // pred_check_branch
    %16 = sbr.rel (0) target = $region9
  $region8: #{discriminator_forward.1} parent=0 // pred_region
    _
  $region9: #{discriminator_forward.1} parent=0 // pred_fallthru
    _
  // Predicated region
  $region10: #{discriminator_forward.1} parent=0 // pred_check
    _
  $region11: #{discriminator_forward.1} parent=0 // pred_check_branch
    %18 = sbr.rel (0) target = $region13
  $region12: #{discriminator_forward.1} parent=0 // pred_region
    _
  $region13: #{discriminator_forward.1} parent=0 // pred_fallthru
    _
  // Predicated region
  $region14: #{discriminator_forward.1} parent=0 // pred_check
    _
  $region15: #{discriminator_forward.1} parent=0 // pred_check_branch
    %20 = sbr.rel (0) target = $region17
  $region16: #{discriminator_forward.1} parent=0 // pred_region
    _
  $region17: #{discriminator_forward.1} parent=0 // pred_fallthru
    _
  // Predicated region
  $region18: #{discriminator_forward.1} parent=0 // pred_check
    _
  $region19: #{discriminator_forward.1} parent=0 // pred_check_branch
    %22 = sbr.rel (0) target = $region21
  $region20: #{discriminator_forward.1} parent=0 // pred_region
    _
  $region21: #{discriminator_forward.1} parent=0 // pred_fallthru
    _
  // Predicated region
  $region22: #{discriminator_forward.1} parent=0 // pred_check
    _
  $region23: #{discriminator_forward.1} parent=0 // pred_check_branch
    %24 = sbr.rel (0) target = $region25
  $region24: #{discriminator_forward.1} parent=0 // pred_region
    _
  $region25: #{discriminator_forward.1} parent=0 // pred_fallthru
    _
  // Predicated region
  $region26: #{discriminator_forward.1} parent=0 // pred_check
    _
  $region27: #{discriminator_forward.1} parent=0 // pred_check_branch
    %26 = sbr.rel (0) target = $region29
  $region28: #{discriminator_forward.1} parent=0 // pred_region
    _
  $region29: #{discriminator_forward.1} parent=0 // pred_fallthru
    _
  %v27 = vld [vmem:[%s0] sm:$0xff]
  %v28 = vld [vmem:[%s0 + $0x8] sm:$0xff]
  %v29 = vld [vmem:[%s1] sm:$0xff]
  %v30 = vld [vmem:[%s1 + $0x8] sm:$0xff]
  %v31 = vld [vmem:[%s1 + $0x10] sm:$0xff]
  %v32 = vld [vmem:[%s1 + $0x18] sm:$0xff]
  %v33 = vld [vmem:[%s1 + $0x20] sm:$0xff]
  %v34 = vld [vmem:[%s1 + $0x28] sm:$0xff]
  %v35 = vld [vmem:[%s1 + $0x30] sm:$0xff]
  %v36 = vld [vmem:[%s1 + $0x38] sm:$0xff]
  %v37 = vld [vmem:[%s1 + $0x40] sm:$0xff]
  %v38 = vld [vmem:[%s1 + $0x48] sm:$0xff]
  %v39 = vld [vmem:[%s1 + $0x50] sm:$0xff]
  %v40 = vld [vmem:[%s1 + $0x58] sm:$0xff]
  %v41 = vld [vmem:[%s1 + $0x60] sm:$0xff]
  %v42 = vld [vmem:[%s1 + $0x68] sm:$0xff]
  %v43 = vld [vmem:[%s1 + $0x70] sm:$0xff]
  %v44 = vld [vmem:[%s1 + $0x78] sm:$0xff]
  %v45 = vld [vmem:[%s2] sm:$0xff]
  %v46 = vld [vmem:[%s2 + $0x8] sm:$0xff]
  %v47 = vld [vmem:[%s2 + $0x10] sm:$0xff]
  %v48 = vld [vmem:[%s2 + $0x18] sm:$0xff]
  %v49 = vld [vmem:[%s2 + $0x20] sm:$0xff]
  %v50 = vld [vmem:[%s2 + $0x28] sm:$0xff]
  %v51 = vld [vmem:[%s2 + $0x30] sm:$0xff]
  %v52 = vld [vmem:[%s2 + $0x38] sm:$0xff]
  %v53 = vld [vmem:[%s2 + $0x40] sm:$0xff]
  %v54 = vld [vmem:[%s2 + $0x48] sm:$0xff]
  %v55 = vld [vmem:[%s2 + $0x50] sm:$0xff]
  %v56 = vld [vmem:[%s2 + $0x58] sm:$0xff]
  %v57 = vld [vmem:[%s2 + $0x60] sm:$0xff]
  %v58 = vld [vmem:[%s2 + $0x68] sm:$0xff]
  %v59 = vld [vmem:[%s2 + $0x70] sm:$0xff]
  %v60 = vld [vmem:[%s2 + $0x78] sm:$0xff]
  %62 = vset.pattern.permute.xlu0 0
  %63 = vperm.xlu0 %62, %v45
  %v64 = vpop.permute.xlu0 %63
  %67 = vset.pattern.permute.xlu0 0
  %68 = vperm.xlu0 %67, %v46
  %v69 = vpop.permute.xlu0 %68
  %72 = vset.pattern.permute.xlu0 0
  %73 = vperm.xlu0 %72, %v47
  %v74 = vpop.permute.xlu0 %73
  %77 = vset.pattern.permute.xlu0 0
  %78 = vperm.xlu0 %77, %v48
  %v79 = vpop.permute.xlu0 %78
  %82 = vset.pattern.permute.xlu0 0
  %83 = vperm.xlu0 %82, %v49
  %v84 = vpop.permute.xlu0 %83
  %87 = vset.pattern.permute.xlu0 0
  %88 = vperm.xlu0 %87, %v50
  %v89 = vpop.permute.xlu0 %88
  %92 = vset.pattern.permute.xlu0 0
  %93 = vperm.xlu0 %92, %v51
  %v94 = vpop.permute.xlu0 %93
  %97 = vset.pattern.permute.xlu0 0
  %98 = vperm.xlu0 %97, %v52
  %v99 = vpop.permute.xlu0 %98
  %102 = vset.pattern.permute.xlu0 0
  %103 = vperm.xlu0 %102, %v53
  %v104 = vpop.permute.xlu0 %103
  %107 = vset.pattern.permute.xlu0 0
  %108 = vperm.xlu0 %107, %v54
  %v109 = vpop.permute.xlu0 %108
  %112 = vset.pattern.permute.xlu0 0
  %113 = vperm.xlu0 %112, %v55
  %v114 = vpop.permute.xlu0 %113
  %117 = vset.pattern.permute.xlu0 0
  %118 = vperm.xlu0 %117, %v56
  %v119 = vpop.permute.xlu0 %118
  %122 = vset.pattern.permute.xlu0 0
  %123 = vperm.xlu0 %122, %v57
  %v124 = vpop.permute.xlu0 %123
  %127 = vset.pattern.permute.xlu0 0
  %128 = vperm.xlu0 %127, %v58
  %v129 = vpop.permute.xlu0 %128
  %132 = vset.pattern.permute.xlu0 0
  %133 = vperm.xlu0 %132, %v59
  %v134 = vpop.permute.xlu0 %133
  %137 = vset.pattern.permute.xlu0 0
  %138 = vperm.xlu0 %137, %v60
  %v139 = vpop.permute.xlu0 %138
  %vm141 = vcmask 130048
  %v143 = vsel %vm141, %v29, 0
  %v146 = vsel %vm141, %v30, 0
  %v149 = vsel %vm141, %v31, 0
  %v152 = vsel %vm141, %v32, 0
  %v155 = vsel %vm141, %v33, 0
  %v158 = vsel %vm141, %v34, 0
  %v161 = vsel %vm141, %v35, 0
  %v164 = vsel %vm141, %v36, 0
  %v167 = vsel %vm141, %v37, 0
  %v170 = vsel %vm141, %v38, 0
  %v173 = vsel %vm141, %v39, 0
  %v176 = vsel %vm141, %v40, 0
  %v179 = vsel %vm141, %v41, 0
  %v182 = vsel %vm141, %v42, 0
  %v185 = vsel %vm141, %v43, 0
  %v188 = vsel %vm141, %v44, 0
  %v191 = vsel %vm141, %v27, 0
  %v194 = vsel %vm141, %v28, 0
  %196 = vmatprep.subr.mxu0 0.0
  %v197 = vand.u32 %v191, 4294901760
  %198 = vmatpush1.xpose.msra.mxu0 %v197
  %199 = vmatprep.subr.mxu0 0.0
  %v200 = vand.u32 %v194, 4294901760
  %201 = vmatpush1.xpose.msra.mxu0 %v200
  %202 = vmatprep.subr.mxu0 0.0
  %203 = vmatpush1.xpose.msra.mxu0 0.0
  %204 = vmatprep.subr.mxu0 0.0
  %205 = vmatpush1.xpose.msra.mxu0 0.0
  %206 = vmatprep.subr.mxu0 0.0
  %207 = vmatpush1.xpose.msra.mxu0 0.0
  %208 = vmatprep.subr.mxu0 0.0
  %209 = vmatpush1.xpose.msra.mxu0 0.0
  %210 = vmatprep.subr.mxu0 0.0
  %211 = vmatpush1.xpose.msra.mxu0 0.0
  %212 = vmatprep.subr.mxu0 0.0
  %213 = vmatpush1.xpose.msra.mxu0 0.0
  %214 = vmatprep.subr.mxu0 0.0
  %215 = vmatpush1.xpose.msra.mxu0 0.0
  %216 = vmatprep.subr.mxu0 0.0
  %217 = vmatpush1.xpose.msra.mxu0 0.0
  %218 = vmatprep.subr.mxu0 0.0
  %219 = vmatpush1.xpose.msra.mxu0 0.0
  %220 = vmatprep.subr.mxu0 0.0
  %221 = vmatpush1.xpose.msra.mxu0 0.0
  %222 = vmatprep.subr.mxu0 0.0
  %223 = vmatpush1.xpose.msra.mxu0 0.0
  %224 = vmatprep.subr.mxu0 0.0
  %225 = vmatpush1.xpose.msra.mxu0 0.0
  %226 = vmatprep.subr.mxu0 0.0
  %227 = vmatpush1.xpose.msra.mxu0 0.0
  %228 = vmatprep.subr.mxu0 0.0
  %229 = vmatpush1.xpose.msra.mxu0 0.0
  %230 = vmatprep.subr.mxu0 0.0
  %231 = vmatpush1.xpose.msra.mxu0 0.0
  %232 = vmatprep.subr.mxu0 0.0
  %233 = vmatpush1.xpose.msra.mxu0 0.0
  %234 = vmatprep.subr.mxu0 0.0
  %235 = vmatpush1.xpose.msra.mxu0 0.0
  %236 = vmatprep.subr.mxu0 0.0
  %237 = vmatpush1.xpose.msra.mxu0 0.0
  %238 = vmatprep.subr.mxu0 0.0
  %239 = vmatpush1.xpose.msra.mxu0 0.0
  %240 = vmatprep.subr.mxu0 0.0
  %241 = vmatpush1.xpose.msra.mxu0 0.0
  %242 = vmatprep.subr.mxu0 0.0
  %243 = vmatpush1.xpose.msra.mxu0 0.0
  %244 = vmatprep.subr.mxu0 0.0
  %245 = vmatpush1.xpose.msra.mxu0 0.0
  %246 = vmatprep.subr.mxu0 0.0
  %247 = vmatpush1.xpose.msra.mxu0 0.0
  %248 = vmatprep.subr.mxu0 0.0
  %249 = vmatpush1.xpose.msra.mxu0 0.0
  %250 = vmatprep.subr.mxu0 0.0
  %251 = vmatpush1.xpose.msra.mxu0 0.0
  %252 = vmatprep.subr.mxu0 0.0
  %253 = vmatpush1.xpose.msra.mxu0 0.0
  %254 = vmatprep.subr.mxu0 0.0
  %255 = vmatpush1.xpose.msra.mxu0 0.0
  %256 = vmatprep.subr.mxu0 0.0
  %257 = vmatpush1.xpose.msra.mxu0 0.0
  %258 = vmatprep.subr.mxu0 0.0
  %259 = vmatpush1.xpose.msra.mxu0 0.0
  %260 = vmatprep.subr.mxu0 0.0
  %261 = vmatpush1.xpose.msra.mxu0 0.0
  %262 = vmatprep.mubr.f32.mxu0 0.0
  %v263 = vand.u32 %v143, 4294901760
  %v264 = vsub.f32 %v143, %v263
  %v265 = vand.u32 %v264, 4294901760
  %v266 = vsub.f32 %v264, %v265
  %v267 = vand.u32 %v266, 4294901760
  %268 = vmatmul.mubr.f32.gmra.mrb[0].mxu0 %v267
  %v269 = vpop.f32.mrb[0].mxu0
  %v270 = vadd.f32 %v64, %v269
  %v271 = vpop.f32.mrb[0].mxu0
  %272 = vmatprep.mubr.f32.mxu0 0.0
  %v273 = vand.u32 %v146, 4294901760
  %v274 = vsub.f32 %v146, %v273
  %v275 = vand.u32 %v274, 4294901760
  %v276 = vsub.f32 %v274, %v275
  %v277 = vand.u32 %v276, 4294901760
  %278 = vmatmul.mubr.f32.gmra.mrb[0].mxu0 %v277
  %v279 = vpop.f32.mrb[0].mxu0
  %v280 = vadd.f32 %v69, %v279
  %v281 = vpop.f32.mrb[0].mxu0
  %282 = vmatprep.mubr.f32.mxu0 0.0
  %v283 = vand.u32 %v149, 4294901760
  %v284 = vsub.f32 %v149, %v283
  %v285 = vand.u32 %v284, 4294901760
  %v286 = vsub.f32 %v284, %v285
  %v287 = vand.u32 %v286, 4294901760
  %288 = vmatmul.mubr.f32.gmra.mrb[0].mxu0 %v287
  %v289 = vpop.f32.mrb[0].mxu0
  %v290 = vadd.f32 %v74, %v289
  %v291 = vpop.f32.mrb[0].mxu0
  %292 = vmatprep.mubr.f32.mxu0 0.0
  %v293 = vand.u32 %v152, 4294901760
  %v294 = vsub.f32 %v152, %v293
  %v295 = vand.u32 %v294, 4294901760
  %v296 = vsub.f32 %v294, %v295
  %v297 = vand.u32 %v296, 4294901760
  %298 = vmatmul.mubr.f32.gmra.mrb[0].mxu0 %v297
  %v299 = vpop.f32.mrb[0].mxu0
  %v300 = vadd.f32 %v79, %v299
  %v301 = vpop.f32.mrb[0].mxu0
  %302 = vmatprep.mubr.f32.mxu0 0.0
  %v303 = vand.u32 %v155, 4294901760
  %v304 = vsub.f32 %v155, %v303
  %v305 = vand.u32 %v304, 4294901760
  %v306 = vsub.f32 %v304, %v305
  %v307 = vand.u32 %v306, 4294901760
  %308 = vmatmul.mubr.f32.gmra.mrb[0].mxu0 %v307
  %v309 = vpop.f32.mrb[0].mxu0
  %v310 = vadd.f32 %v84, %v309
  %v311 = vpop.f32.mrb[0].mxu0
  %312 = vmatprep.mubr.f32.mxu0 0.0
  %v313 = vand.u32 %v158, 4294901760
  %v314 = vsub.f32 %v158, %v313
  %v315 = vand.u32 %v314, 4294901760
  %v316 = vsub.f32 %v314, %v315
  %v317 = vand.u32 %v316, 4294901760
  %318 = vmatmul.mubr.f32.gmra.mrb[0].mxu0 %v317
  %v319 = vpop.f32.mrb[0].mxu0
  %v320 = vadd.f32 %v89, %v319
  %v321 = vpop.f32.mrb[0].mxu0
  %322 = vmatprep.mubr.f32.mxu0 0.0
  %v323 = vand.u32 %v161, 4294901760
  %v324 = vsub.f32 %v161, %v323
  %v325 = vand.u32 %v324, 4294901760
  %v326 = vsub.f32 %v324, %v325
  %v327 = vand.u32 %v326, 4294901760
  %328 = vmatmul.mubr.f32.gmra.mrb[0].mxu0 %v327
  %v329 = vpop.f32.mrb[0].mxu0
  %v330 = vadd.f32 %v94, %v329
  %v331 = vpop.f32.mrb[0].mxu0
  %332 = vmatprep.mubr.f32.mxu0 0.0
  %v333 = vand.u32 %v164, 4294901760
  %v334 = vsub.f32 %v164, %v333
  %v335 = vand.u32 %v334, 4294901760
  %v336 = vsub.f32 %v334, %v335
  %v337 = vand.u32 %v336, 4294901760
  %338 = vmatmul.mubr.f32.gmra.mrb[0].mxu0 %v337
  %v339 = vpop.f32.mrb[0].mxu0
  %v340 = vadd.f32 %v99, %v339
  %v341 = vpop.f32.mrb[0].mxu0
  %342 = vmatprep.mubr.f32.mxu0 0.0
  %v343 = vand.u32 %v167, 4294901760
  %v344 = vsub.f32 %v167, %v343
  %v345 = vand.u32 %v344, 4294901760
  %v346 = vsub.f32 %v344, %v345
  %v347 = vand.u32 %v346, 4294901760
  %348 = vmatmul.mubr.f32.gmra.mrb[0].mxu0 %v347
  %v349 = vpop.f32.mrb[0].mxu0
  %v350 = vadd.f32 %v104, %v349
  %v351 = vpop.f32.mrb[0].mxu0
  %352 = vmatprep.mubr.f32.mxu0 0.0
  %v353 = vand.u32 %v170, 4294901760
  %v354 = vsub.f32 %v170, %v353
  %v355 = vand.u32 %v354, 4294901760
  %v356 = vsub.f32 %v354, %v355
  %v357 = vand.u32 %v356, 4294901760
  %358 = vmatmul.mubr.f32.gmra.mrb[0].mxu0 %v357
  %v359 = vpop.f32.mrb[0].mxu0
  %v360 = vadd.f32 %v109, %v359
  %v361 = vpop.f32.mrb[0].mxu0
  %362 = vmatprep.mubr.f32.mxu0 0.0
  %v363 = vand.u32 %v173, 4294901760
  %v364 = vsub.f32 %v173, %v363
  %v365 = vand.u32 %v364, 4294901760
  %v366 = vsub.f32 %v364, %v365
  %v367 = vand.u32 %v366, 4294901760
  %368 = vmatmul.mubr.f32.gmra.mrb[0].mxu0 %v367
  %v369 = vpop.f32.mrb[0].mxu0
  %v370 = vadd.f32 %v114, %v369
  %v371 = vpop.f32.mrb[0].mxu0
  %372 = vmatprep.mubr.f32.mxu0 0.0
  %v373 = vand.u32 %v176, 4294901760
  %v374 = vsub.f32 %v176, %v373
  %v375 = vand.u32 %v374, 4294901760
  %v376 = vsub.f32 %v374, %v375
  %v377 = vand.u32 %v376, 4294901760
  %378 = vmatmul.mubr.f32.gmra.mrb[0].mxu0 %v377
  %v379 = vpop.f32.mrb[0].mxu0
  %v380 = vadd.f32 %v119, %v379
  %v381 = vpop.f32.mrb[0].mxu0
  %382 = vmatprep.mubr.f32.mxu0 0.0
  %v383 = vand.u32 %v179, 4294901760
  %v384 = vsub.f32 %v179, %v383
  %v385 = vand.u32 %v384, 4294901760
  %v386 = vsub.f32 %v384, %v385
  %v387 = vand.u32 %v386, 4294901760
  %388 = vmatmul.mubr.f32.gmra.mrb[0].mxu0 %v387
  %v389 = vpop.f32.mrb[0].mxu0
  %v390 = vadd.f32 %v124, %v389
  %v391 = vpop.f32.mrb[0].mxu0
  %392 = vmatprep.mubr.f32.mxu0 0.0
  %v393 = vand.u32 %v182, 4294901760
  %v394 = vsub.f32 %v182, %v393
  %v395 = vand.u32 %v394, 4294901760
  %v396 = vsub.f32 %v394, %v395
  %v397 = vand.u32 %v396, 4294901760
  %398 = vmatmul.mubr.f32.gmra.mrb[0].mxu0 %v397
  %v399 = vpop.f32.mrb[0].mxu0
  %v400 = vadd.f32 %v129, %v399
  %v401 = vpop.f32.mrb[0].mxu0
  %402 = vmatprep.mubr.f32.mxu0 0.0
  %v403 = vand.u32 %v185, 4294901760
  %v404 = vsub.f32 %v185, %v403
  %v405 = vand.u32 %v404, 4294901760
  %v406 = vsub.f32 %v404, %v405
  %v407 = vand.u32 %v406, 4294901760
  %408 = vmatmul.mubr.f32.gmra.mrb[0].mxu0 %v407
  %v409 = vpop.f32.mrb[0].mxu0
  %v410 = vadd.f32 %v134, %v409
  %v411 = vpop.f32.mrb[0].mxu0
  %412 = vmatprep.mubr.f32.mxu0 0.0
  %v413 = vand.u32 %v188, 4294901760
  %v414 = vsub.f32 %v188, %v413
  %v415 = vand.u32 %v414, 4294901760
  %v416 = vsub.f32 %v414, %v415
  %v417 = vand.u32 %v416, 4294901760
  %418 = vmatmul.mubr.f32.gmra.mrb[0].mxu0 %v417
  %v419 = vpop.f32.mrb[0].mxu0
  %v420 = vadd.f32 %v139, %v419
  %v421 = vpop.f32.mrb[0].mxu0
  %422 = vdwg.mxu0
  %423 = vmatprep.subr.mxu0 0.0
  %v424 = vand.u32 %v191, 4294901760
  %v425 = vsub.f32 %v191, %v424
  %v426 = vand.u32 %v425, 4294901760
  %v427 = vsub.f32 %v425, %v426
  %v428 = vand.u32 %v427, 4294901760
  %429 = vmatpush1.xpose.msra.mxu0 %v428
  %430 = vmatprep.subr.mxu0 0.0
  %v431 = vand.u32 %v194, 4294901760
  %v432 = vsub.f32 %v194, %v431
  %v433 = vand.u32 %v432, 4294901760
  %v434 = vsub.f32 %v432, %v433
  %v435 = vand.u32 %v434, 4294901760
  %436 = vmatpush1.xpose.msra.mxu0 %v435
  %437 = vmatprep.subr.mxu0 0.0
  %438 = vmatpush1.xpose.msra.mxu0 0.0
  %439 = vmatprep.subr.mxu0 0.0
  %440 = vmatpush1.xpose.msra.mxu0 0.0
  %441 = vmatprep.subr.mxu0 0.0
  %442 = vmatpush1.xpose.msra.mxu0 0.0
  %443 = vmatprep.subr.mxu0 0.0
  %444 = vmatpush1.xpose.msra.mxu0 0.0
  %445 = vmatprep.subr.mxu0 0.0
  %446 = vmatpush1.xpose.msra.mxu0 0.0
  %447 = vmatprep.subr.mxu0 0.0
  %448 = vmatpush1.xpose.msra.mxu0 0.0
  %449 = vmatprep.subr.mxu0 0.0
  %450 = vmatpush1.xpose.msra.mxu0 0.0
  %451 = vmatprep.subr.mxu0 0.0
  %452 = vmatpush1.xpose.msra.mxu0 0.0
  %453 = vmatprep.subr.mxu0 0.0
  %454 = vmatpush1.xpose.msra.mxu0 0.0
  %455 = vmatprep.subr.mxu0 0.0
  %456 = vmatpush1.xpose.msra.mxu0 0.0
  %457 = vmatprep.subr.mxu0 0.0
  %458 = vmatpush1.xpose.msra.mxu0 0.0
  %459 = vmatprep.subr.mxu0 0.0
  %460 = vmatpush1.xpose.msra.mxu0 0.0
  %461 = vmatprep.subr.mxu0 0.0
  %462 = vmatpush1.xpose.msra.mxu0 0.0
  %463 = vmatprep.subr.mxu0 0.0
  %464 = vmatpush1.xpose.msra.mxu0 0.0
  %465 = vmatprep.subr.mxu0 0.0
  %466 = vmatpush1.xpose.msra.mxu0 0.0
  %467 = vmatprep.subr.mxu0 0.0
  %468 = vmatpush1.xpose.msra.mxu0 0.0
  %469 = vmatprep.subr.mxu0 0.0
  %470 = vmatpush1.xpose.msra.mxu0 0.0
  %471 = vmatprep.subr.mxu0 0.0
  %472 = vmatpush1.xpose.msra.mxu0 0.0
  %473 = vmatprep.subr.mxu0 0.0
  %474 = vmatpush1.xpose.msra.mxu0 0.0
  %475 = vmatprep.subr.mxu0 0.0
  %476 = vmatpush1.xpose.msra.mxu0 0.0
  %477 = vmatprep.subr.mxu0 0.0
  %478 = vmatpush1.xpose.msra.mxu0 0.0
  %479 = vmatprep.subr.mxu0 0.0
  %480 = vmatpush1.xpose.msra.mxu0 0.0
  %481 = vmatprep.subr.mxu0 0.0
  %482 = vmatpush1.xpose.msra.mxu0 0.0
  %483 = vmatprep.subr.mxu0 0.0
  %484 = vmatpush1.xpose.msra.mxu0 0.0
  %485 = vmatprep.subr.mxu0 0.0
  %486 = vmatpush1.xpose.msra.mxu0 0.0
  %487 = vmatprep.subr.mxu0 0.0
  %488 = vmatpush1.xpose.msra.mxu0 0.0
  %489 = vmatprep.subr.mxu0 0.0
  %490 = vmatpush1.xpose.msra.mxu0 0.0
  %491 = vmatprep.subr.mxu0 0.0
  %492 = vmatpush1.xpose.msra.mxu0 0.0
  %493 = vmatprep.subr.mxu0 0.0
  %494 = vmatpush1.xpose.msra.mxu0 0.0
  %495 = vmatprep.subr.mxu0 0.0
  %496 = vmatpush1.xpose.msra.mxu0 0.0
  %497 = vmatprep.mubr.f32.mxu0 0.0
  %v498 = vand.u32 %v143, 4294901760
  %499 = vmatmul.mubr.f32.gmra.mrb[0].mxu0 %v498
  %v500 = vpop.f32.mrb[0].mxu0
  %v501 = vadd.f32 %v270, %v500
  %v502 = vpop.f32.mrb[0].mxu0
  %503 = vmatprep.mubr.f32.mxu0 0.0
  %v504 = vand.u32 %v146, 4294901760
  %505 = vmatmul.mubr.f32.gmra.mrb[0].mxu0 %v504
  %v506 = vpop.f32.mrb[0].mxu0
  %v507 = vadd.f32 %v280, %v506
  %v508 = vpop.f32.mrb[0].mxu0
  %509 = vmatprep.mubr.f32.mxu0 0.0
  %v510 = vand.u32 %v149, 4294901760
  %511 = vmatmul.mubr.f32.gmra.mrb[0].mxu0 %v510
  %v512 = vpop.f32.mrb[0].mxu0
  %v513 = vadd.f32 %v290, %v512
  %v514 = vpop.f32.mrb[0].mxu0
  %515 = vmatprep.mubr.f32.mxu0 0.0
  %v516 = vand.u32 %v152, 4294901760
  %517 = vmatmul.mubr.f32.gmra.mrb[0].mxu0 %v516
  %v518 = vpop.f32.mrb[0].mxu0
  %v519 = vadd.f32 %v300, %v518
  %v520 = vpop.f32.mrb[0].mxu0
  %521 = vmatprep.mubr.f32.mxu0 0.0
  %v522 = vand.u32 %v155, 4294901760
  %523 = vmatmul.mubr.f32.gmra.mrb[0].mxu0 %v522
  %v524 = vpop.f32.mrb[0].mxu0
  %v525 = vadd.f32 %v310, %v524
  %v526 = vpop.f32.mrb[0].mxu0
  %527 = vmatprep.mubr.f32.mxu0 0.0
  %v528 = vand.u32 %v158, 4294901760
  %529 = vmatmul.mubr.f32.gmra.mrb[0].mxu0 %v528
  %v530 = vpop.f32.mrb[0].mxu0
  %v531 = vadd.f32 %v320, %v530
  %v532 = vpop.f32.mrb[0].mxu0
  %533 = vmatprep.mubr.f32.mxu0 0.0
  %v534 = vand.u32 %v161, 4294901760
  %535 = vmatmul.mubr.f32.gmra.mrb[0].mxu0 %v534
  %v536 = vpop.f32.mrb[0].mxu0
  %v537 = vadd.f32 %v330, %v536
  %v538 = vpop.f32.mrb[0].mxu0
  %539 = vmatprep.mubr.f32.mxu0 0.0
  %v540 = vand.u32 %v164, 4294901760
  %541 = vmatmul.mubr.f32.gmra.mrb[0].mxu0 %v540
  %v542 = vpop.f32.mrb[0].mxu0
  %v543 = vadd.f32 %v340, %v542
  %v544 = vpop.f32.mrb[0].mxu0
  %545 = vmatprep.mubr.f32.mxu0 0.0
  %v546 = vand.u32 %v167, 4294901760
  %547 = vmatmul.mubr.f32.gmra.mrb[0].mxu0 %v546
  %v548 = vpop.f32.mrb[0].mxu0
  %v549 = vadd.f32 %v350, %v548
  %v550 = vpop.f32.mrb[0].mxu0
  %551 = vmatprep.mubr.f32.mxu0 0.0
  %v552 = vand.u32 %v170, 4294901760
  %553 = vmatmul.mubr.f32.gmra.mrb[0].mxu0 %v552
  %v554 = vpop.f32.mrb[0].mxu0
  %v555 = vadd.f32 %v360, %v554
  %v556 = vpop.f32.mrb[0].mxu0
  %557 = vmatprep.mubr.f32.mxu0 0.0
  %v558 = vand.u32 %v173, 4294901760
  %559 = vmatmul.mubr.f32.gmra.mrb[0].mxu0 %v558
  %v560 = vpop.f32.mrb[0].mxu0
  %v561 = vadd.f32 %v370, %v560
  %v562 = vpop.f32.mrb[0].mxu0
  %563 = vmatprep.mubr.f32.mxu0 0.0
  %v564 = vand.u32 %v176, 4294901760
  %565 = vmatmul.mubr.f32.gmra.mrb[0].mxu0 %v564
  %v566 = vpop.f32.mrb[0].mxu0
  %v567 = vadd.f32 %v380, %v566
  %v568 = vpop.f32.mrb[0].mxu0
  %569 = vmatprep.mubr.f32.mxu0 0.0
  %v570 = vand.u32 %v179, 4294901760
  %571 = vmatmul.mubr.f32.gmra.mrb[0].mxu0 %v570
  %v572 = vpop.f32.mrb[0].mxu0
  %v573 = vadd.f32 %v390, %v572
  %v574 = vpop.f32.mrb[0].mxu0
  %575 = vmatprep.mubr.f32.mxu0 0.0
  %v576 = vand.u32 %v182, 4294901760
  %577 = vmatmul.mubr.f32.gmra.mrb[0].mxu0 %v576
  %v578 = vpop.f32.mrb[0].mxu0
  %v579 = vadd.f32 %v400, %v578
  %v580 = vpop.f32.mrb[0].mxu0
  %581 = vmatprep.mubr.f32.mxu0 0.0
  %v582 = vand.u32 %v185, 4294901760
  %583 = vmatmul.mubr.f32.gmra.mrb[0].mxu0 %v582
  %v584 = vpop.f32.mrb[0].mxu0
  %v585 = vadd.f32 %v410, %v584
  %v586 = vpop.f32.mrb[0].mxu0
  %587 = vmatprep.mubr.f32.mxu0 0.0
  %v588 = vand.u32 %v188, 4294901760
  %589 = vmatmul.mubr.f32.gmra.mrb[0].mxu0 %v588
  %v590 = vpop.f32.mrb[0].mxu0
  %v591 = vadd.f32 %v420, %v590
  %v592 = vpop.f32.mrb[0].mxu0
  %593 = vdwg.mxu0
  %594 = vmatprep.subr.mxu0 0.0
  %v595 = vand.u32 %v191, 4294901760
  %v596 = vsub.f32 %v191, %v595
  %597 = vmatpush1.xpose.msra.mxu0 %v596
  %598 = vmatprep.subr.mxu0 0.0
  %v599 = vand.u32 %v194, 4294901760
  %v600 = vsub.f32 %v194, %v599
  %601 = vmatpush1.xpose.msra.mxu0 %v600
  %602 = vmatprep.subr.mxu0 0.0
  %603 = vmatpush1.xpose.msra.mxu0 0.0
  %604 = vmatprep.subr.mxu0 0.0
  %605 = vmatpush1.xpose.msra.mxu0 0.0
  %606 = vmatprep.subr.mxu0 0.0
  %607 = vmatpush1.xpose.msra.mxu0 0.0
  %608 = vmatprep.subr.mxu0 0.0
  %609 = vmatpush1.xpose.msra.mxu0 0.0
  %610 = vmatprep.subr.mxu0 0.0
  %611 = vmatpush1.xpose.msra.mxu0 0.0
  %612 = vmatprep.subr.mxu0 0.0
  %613 = vmatpush1.xpose.msra.mxu0 0.0
  %614 = vmatprep.subr.mxu0 0.0
  %615 = vmatpush1.xpose.msra.mxu0 0.0
  %616 = vmatprep.subr.mxu0 0.0
  %617 = vmatpush1.xpose.msra.mxu0 0.0
  %618 = vmatprep.subr.mxu0 0.0
  %619 = vmatpush1.xpose.msra.mxu0 0.0
  %620 = vmatprep.subr.mxu0 0.0
  %621 = vmatpush1.xpose.msra.mxu0 0.0
  %622 = vmatprep.subr.mxu0 0.0
  %623 = vmatpush1.xpose.msra.mxu0 0.0
  %624 = vmatprep.subr.mxu0 0.0
  %625 = vmatpush1.xpose.msra.mxu0 0.0
  %626 = vmatprep.subr.mxu0 0.0
  %627 = vmatpush1.xpose.msra.mxu0 0.0
  %628 = vmatprep.subr.mxu0 0.0
  %629 = vmatpush1.xpose.msra.mxu0 0.0
  %630 = vmatprep.subr.mxu0 0.0
  %631 = vmatpush1.xpose.msra.mxu0 0.0
  %632 = vmatprep.subr.mxu0 0.0
  %633 = vmatpush1.xpose.msra.mxu0 0.0
  %634 = vmatprep.subr.mxu0 0.0
  %635 = vmatpush1.xpose.msra.mxu0 0.0
  %636 = vmatprep.subr.mxu0 0.0
  %637 = vmatpush1.xpose.msra.mxu0 0.0
  %638 = vmatprep.subr.mxu0 0.0
  %639 = vmatpush1.xpose.msra.mxu0 0.0
  %640 = vmatprep.subr.mxu0 0.0
  %641 = vmatpush1.xpose.msra.mxu0 0.0
  %642 = vmatprep.subr.mxu0 0.0
  %643 = vmatpush1.xpose.msra.mxu0 0.0
  %644 = vmatprep.subr.mxu0 0.0
  %645 = vmatpush1.xpose.msra.mxu0 0.0
  %646 = vmatprep.subr.mxu0 0.0
  %647 = vmatpush1.xpose.msra.mxu0 0.0
  %648 = vmatprep.subr.mxu0 0.0
  %649 = vmatpush1.xpose.msra.mxu0 0.0
  %650 = vmatprep.subr.mxu0 0.0
  %651 = vmatpush1.xpose.msra.mxu0 0.0
  %652 = vmatprep.subr.mxu0 0.0
  %653 = vmatpush1.xpose.msra.mxu0 0.0
  %654 = vmatprep.subr.mxu0 0.0
  %655 = vmatpush1.xpose.msra.mxu0 0.0
  %656 = vmatprep.subr.mxu0 0.0
  %657 = vmatpush1.xpose.msra.mxu0 0.0
  %658 = vmatprep.subr.mxu0 0.0
  %659 = vmatpush1.xpose.msra.mxu0 0.0
  %660 = vmatprep.subr.mxu0 0.0
  %661 = vmatpush1.xpose.msra.mxu0 0.0
  %662 = vmatprep.mubr.f32.mxu0 0.0
  %v663 = vand.u32 %v143, 4294901760
  %v664 = vsub.f32 %v143, %v663
  %665 = vmatmul.mubr.f32.gmra.mrb[0].mxu0 %v664
  %v666 = vpop.f32.mrb[0].mxu0
  %v667 = vadd.f32 %v501, %v666
  %v668 = vpop.f32.mrb[0].mxu0
  %669 = vmatprep.mubr.f32.mxu0 0.0
  %v670 = vand.u32 %v146, 4294901760
  %v671 = vsub.f32 %v146, %v670
  %672 = vmatmul.mubr.f32.gmra.mrb[0].mxu0 %v671
  %v673 = vpop.f32.mrb[0].mxu0
  %v674 = vadd.f32 %v507, %v673
  %v675 = vpop.f32.mrb[0].mxu0
  %676 = vmatprep.mubr.f32.mxu0 0.0
  %v677 = vand.u32 %v149, 4294901760
  %v678 = vsub.f32 %v149, %v677
  %679 = vmatmul.mubr.f32.gmra.mrb[0].mxu0 %v678
  %v680 = vpop.f32.mrb[0].mxu0
  %v681 = vadd.f32 %v513, %v680
  %v682 = vpop.f32.mrb[0].mxu0
  %683 = vmatprep.mubr.f32.mxu0 0.0
  %v684 = vand.u32 %v152, 4294901760
  %v685 = vsub.f32 %v152, %v684
  %686 = vmatmul.mubr.f32.gmra.mrb[0].mxu0 %v685
  %v687 = vpop.f32.mrb[0].mxu0
  %v688 = vadd.f32 %v519, %v687
  %v689 = vpop.f32.mrb[0].mxu0
  %690 = vmatprep.mubr.f32.mxu0 0.0
  %v691 = vand.u32 %v155, 4294901760
  %v692 = vsub.f32 %v155, %v691
  %693 = vmatmul.mubr.f32.gmra.mrb[0].mxu0 %v692
  %v694 = vpop.f32.mrb[0].mxu0
  %v695 = vadd.f32 %v525, %v694
  %v696 = vpop.f32.mrb[0].mxu0
  %697 = vmatprep.mubr.f32.mxu0 0.0
  %v698 = vand.u32 %v158, 4294901760
  %v699 = vsub.f32 %v158, %v698
  %700 = vmatmul.mubr.f32.gmra.mrb[0].mxu0 %v699
  %v701 = vpop.f32.mrb[0].mxu0
  %v702 = vadd.f32 %v531, %v701
  %v703 = vpop.f32.mrb[0].mxu0
  %704 = vmatprep.mubr.f32.mxu0 0.0
  %v705 = vand.u32 %v161, 4294901760
  %v706 = vsub.f32 %v161, %v705
  %707 = vmatmul.mubr.f32.gmra.mrb[0].mxu0 %v706
  %v708 = vpop.f32.mrb[0].mxu0
  %v709 = vadd.f32 %v537, %v708
  %v710 = vpop.f32.mrb[0].mxu0
  %711 = vmatprep.mubr.f32.mxu0 0.0
  %v712 = vand.u32 %v164, 4294901760
  %v713 = vsub.f32 %v164, %v712
  %714 = vmatmul.mubr.f32.gmra.mrb[0].mxu0 %v713
  %v715 = vpop.f32.mrb[0].mxu0
  %v716 = vadd.f32 %v543, %v715
  %v717 = vpop.f32.mrb[0].mxu0
  %718 = vmatprep.mubr.f32.mxu0 0.0
  %v719 = vand.u32 %v167, 4294901760
  %v720 = vsub.f32 %v167, %v719
  %721 = vmatmul.mubr.f32.gmra.mrb[0].mxu0 %v720
  %v722 = vpop.f32.mrb[0].mxu0
  %v723 = vadd.f32 %v549, %v722
  %v724 = vpop.f32.mrb[0].mxu0
  %725 = vmatprep.mubr.f32.mxu0 0.0
  %v726 = vand.u32 %v170, 4294901760
  %v727 = vsub.f32 %v170, %v726
  %728 = vmatmul.mubr.f32.gmra.mrb[0].mxu0 %v727
  %v729 = vpop.f32.mrb[0].mxu0
  %v730 = vadd.f32 %v555, %v729
  %v731 = vpop.f32.mrb[0].mxu0
  %732 = vmatprep.mubr.f32.mxu0 0.0
  %v733 = vand.u32 %v173, 4294901760
  %v734 = vsub.f32 %v173, %v733
  %735 = vmatmul.mubr.f32.gmra.mrb[0].mxu0 %v734
  %v736 = vpop.f32.mrb[0].mxu0
  %v737 = vadd.f32 %v561, %v736
  %v738 = vpop.f32.mrb[0].mxu0
  %739 = vmatprep.mubr.f32.mxu0 0.0
  %v740 = vand.u32 %v176, 4294901760
  %v741 = vsub.f32 %v176, %v740
  %742 = vmatmul.mubr.f32.gmra.mrb[0].mxu0 %v741
  %v743 = vpop.f32.mrb[0].mxu0
  %v744 = vadd.f32 %v567, %v743
  %v745 = vpop.f32.mrb[0].mxu0
  %746 = vmatprep.mubr.f32.mxu0 0.0
  %v747 = vand.u32 %v179, 4294901760
  %v748 = vsub.f32 %v179, %v747
  %749 = vmatmul.mubr.f32.gmra.mrb[0].mxu0 %v748
  %v750 = vpop.f32.mrb[0].mxu0
  %v751 = vadd.f32 %v573, %v750
  %v752 = vpop.f32.mrb[0].mxu0
  %753 = vmatprep.mubr.f32.mxu0 0.0
  %v754 = vand.u32 %v182, 4294901760
  %v755 = vsub.f32 %v182, %v754
  %756 = vmatmul.mubr.f32.gmra.mrb[0].mxu0 %v755
  %v757 = vpop.f32.mrb[0].mxu0
  %v758 = vadd.f32 %v579, %v757
  %v759 = vpop.f32.mrb[0].mxu0
  %760 = vmatprep.mubr.f32.mxu0 0.0
  %v761 = vand.u32 %v185, 4294901760
  %v762 = vsub.f32 %v185, %v761
  %763 = vmatmul.mubr.f32.gmra.mrb[0].mxu0 %v762
  %v764 = vpop.f32.mrb[0].mxu0
  %v765 = vadd.f32 %v585, %v764
  %v766 = vpop.f32.mrb[0].mxu0
  %767 = vmatprep.mubr.f32.mxu0 0.0
  %v768 = vand.u32 %v188, 4294901760
  %v769 = vsub.f32 %v188, %v768
  %770 = vmatmul.mubr.f32.gmra.mrb[0].mxu0 %v769
  %v771 = vpop.f32.mrb[0].mxu0
  %v772 = vadd.f32 %v591, %v771
  %v773 = vpop.f32.mrb[0].mxu0
  %774 = vdwg.mxu0
  %775 = vmatprep.subr.mxu0 0.0
  %v776 = vand.u32 %v191, 4294901760
  %777 = vmatpush1.xpose.msra.mxu0 %v776
  %778 = vmatprep.subr.mxu0 0.0
  %v779 = vand.u32 %v194, 4294901760
  %780 = vmatpush1.xpose.msra.mxu0 %v779
  %781 = vmatprep.subr.mxu0 0.0
  %782 = vmatpush1.xpose.msra.mxu0 0.0
  %783 = vmatprep.subr.mxu0 0.0
  %784 = vmatpush1.xpose.msra.mxu0 0.0
  %785 = vmatprep.subr.mxu0 0.0
  %786 = vmatpush1.xpose.msra.mxu0 0.0
  %787 = vmatprep.subr.mxu0 0.0
  %788 = vmatpush1.xpose.msra.mxu0 0.0
  %789 = vmatprep.subr.mxu0 0.0
  %790 = vmatpush1.xpose.msra.mxu0 0.0
  %791 = vmatprep.subr.mxu0 0.0
  %792 = vmatpush1.xpose.msra.mxu0 0.0
  %793 = vmatprep.subr.mxu0 0.0
  %794 = vmatpush1.xpose.msra.mxu0 0.0
  %795 = vmatprep.subr.mxu0 0.0
  %796 = vmatpush1.xpose.msra.mxu0 0.0
  %797 = vmatprep.subr.mxu0 0.0
  %798 = vmatpush1.xpose.msra.mxu0 0.0
  %799 = vmatprep.subr.mxu0 0.0
  %800 = vmatpush1.xpose.msra.mxu0 0.0
  %801 = vmatprep.subr.mxu0 0.0
  %802 = vmatpush1.xpose.msra.mxu0 0.0
  %803 = vmatprep.subr.mxu0 0.0
  %804 = vmatpush1.xpose.msra.mxu0 0.0
  %805 = vmatprep.subr.mxu0 0.0
  %806 = vmatpush1.xpose.msra.mxu0 0.0
  %807 = vmatprep.subr.mxu0 0.0
  %808 = vmatpush1.xpose.msra.mxu0 0.0
  %809 = vmatprep.subr.mxu0 0.0
  %810 = vmatpush1.xpose.msra.mxu0 0.0
  %811 = vmatprep.subr.mxu0 0.0
  %812 = vmatpush1.xpose.msra.mxu0 0.0
  %813 = vmatprep.subr.mxu0 0.0
  %814 = vmatpush1.xpose.msra.mxu0 0.0
  %815 = vmatprep.subr.mxu0 0.0
  %816 = vmatpush1.xpose.msra.mxu0 0.0
  %817 = vmatprep.subr.mxu0 0.0
  %818 = vmatpush1.xpose.msra.mxu0 0.0
  %819 = vmatprep.subr.mxu0 0.0
  %820 = vmatpush1.xpose.msra.mxu0 0.0
  %821 = vmatprep.subr.mxu0 0.0
  %822 = vmatpush1.xpose.msra.mxu0 0.0
  %823 = vmatprep.subr.mxu0 0.0
  %824 = vmatpush1.xpose.msra.mxu0 0.0
  %825 = vmatprep.subr.mxu0 0.0
  %826 = vmatpush1.xpose.msra.mxu0 0.0
  %827 = vmatprep.subr.mxu0 0.0
  %828 = vmatpush1.xpose.msra.mxu0 0.0
  %829 = vmatprep.subr.mxu0 0.0
  %830 = vmatpush1.xpose.msra.mxu0 0.0
  %831 = vmatprep.subr.mxu0 0.0
  %832 = vmatpush1.xpose.msra.mxu0 0.0
  %833 = vmatprep.subr.mxu0 0.0
  %834 = vmatpush1.xpose.msra.mxu0 0.0
  %835 = vmatprep.subr.mxu0 0.0
  %836 = vmatpush1.xpose.msra.mxu0 0.0
  %837 = vmatprep.subr.mxu0 0.0
  %838 = vmatpush1.xpose.msra.mxu0 0.0
  %839 = vmatprep.subr.mxu0 0.0
  %840 = vmatpush1.xpose.msra.mxu0 0.0
  %841 = vmatprep.mubr.f32.mxu0 0.0
  %v842 = vand.u32 %v143, 4294901760
  %v843 = vsub.f32 %v143, %v842
  %v844 = vand.u32 %v843, 4294901760
  %845 = vmatmul.mubr.f32.gmra.mrb[0].mxu0 %v844
  %v846 = vpop.f32.mrb[0].mxu0
  %v847 = vadd.f32 %v667, %v846
  %v848 = vpop.f32.mrb[0].mxu0
  %849 = vmatprep.mubr.f32.mxu0 0.0
  %v850 = vand.u32 %v146, 4294901760
  %v851 = vsub.f32 %v146, %v850
  %v852 = vand.u32 %v851, 4294901760
  %853 = vmatmul.mubr.f32.gmra.mrb[0].mxu0 %v852
  %v854 = vpop.f32.mrb[0].mxu0
  %v855 = vadd.f32 %v674, %v854
  %v856 = vpop.f32.mrb[0].mxu0
  %857 = vmatprep.mubr.f32.mxu0 0.0
  %v858 = vand.u32 %v149, 4294901760
  %v859 = vsub.f32 %v149, %v858
  %v860 = vand.u32 %v859, 4294901760
  %861 = vmatmul.mubr.f32.gmra.mrb[0].mxu0 %v860
  %v862 = vpop.f32.mrb[0].mxu0
  %v863 = vadd.f32 %v681, %v862
  %v864 = vpop.f32.mrb[0].mxu0
  %865 = vmatprep.mubr.f32.mxu0 0.0
  %v866 = vand.u32 %v152, 4294901760
  %v867 = vsub.f32 %v152, %v866
  %v868 = vand.u32 %v867, 4294901760
  %869 = vmatmul.mubr.f32.gmra.mrb[0].mxu0 %v868
  %v870 = vpop.f32.mrb[0].mxu0
  %v871 = vadd.f32 %v688, %v870
  %v872 = vpop.f32.mrb[0].mxu0
  %873 = vmatprep.mubr.f32.mxu0 0.0
  %v874 = vand.u32 %v155, 4294901760
  %v875 = vsub.f32 %v155, %v874
  %v876 = vand.u32 %v875, 4294901760
  %877 = vmatmul.mubr.f32.gmra.mrb[0].mxu0 %v876
  %v878 = vpop.f32.mrb[0].mxu0
  %v879 = vadd.f32 %v695, %v878
  %v880 = vpop.f32.mrb[0].mxu0
  %881 = vmatprep.mubr.f32.mxu0 0.0
  %v882 = vand.u32 %v158, 4294901760
  %v883 = vsub.f32 %v158, %v882
  %v884 = vand.u32 %v883, 4294901760
  %885 = vmatmul.mubr.f32.gmra.mrb[0].mxu0 %v884
  %v886 = vpop.f32.mrb[0].mxu0
  %v887 = vadd.f32 %v702, %v886
  %v888 = vpop.f32.mrb[0].mxu0
  %889 = vmatprep.mubr.f32.mxu0 0.0
  %v890 = vand.u32 %v161, 4294901760
  %v891 = vsub.f32 %v161, %v890
  %v892 = vand.u32 %v891, 4294901760
  %893 = vmatmul.mubr.f32.gmra.mrb[0].mxu0 %v892
  %v894 = vpop.f32.mrb[0].mxu0
  %v895 = vadd.f32 %v709, %v894
  %v896 = vpop.f32.mrb[0].mxu0
  %897 = vmatprep.mubr.f32.mxu0 0.0
  %v898 = vand.u32 %v164, 4294901760
  %v899 = vsub.f32 %v164, %v898
  %v900 = vand.u32 %v899, 4294901760
  %901 = vmatmul.mubr.f32.gmra.mrb[0].mxu0 %v900
  %v902 = vpop.f32.mrb[0].mxu0
  %v903 = vadd.f32 %v716, %v902
  %v904 = vpop.f32.mrb[0].mxu0
  %905 = vmatprep.mubr.f32.mxu0 0.0
  %v906 = vand.u32 %v167, 4294901760
  %v907 = vsub.f32 %v167, %v906
  %v908 = vand.u32 %v907, 4294901760
  %909 = vmatmul.mubr.f32.gmra.mrb[0].mxu0 %v908
  %v910 = vpop.f32.mrb[0].mxu0
  %v911 = vadd.f32 %v723, %v910
  %v912 = vpop.f32.mrb[0].mxu0
  %913 = vmatprep.mubr.f32.mxu0 0.0
  %v914 = vand.u32 %v170, 4294901760
  %v915 = vsub.f32 %v170, %v914
  %v916 = vand.u32 %v915, 4294901760
  %917 = vmatmul.mubr.f32.gmra.mrb[0].mxu0 %v916
  %v918 = vpop.f32.mrb[0].mxu0
  %v919 = vadd.f32 %v730, %v918
  %v920 = vpop.f32.mrb[0].mxu0
  %921 = vmatprep.mubr.f32.mxu0 0.0
  %v922 = vand.u32 %v173, 4294901760
  %v923 = vsub.f32 %v173, %v922
  %v924 = vand.u32 %v923, 4294901760
  %925 = vmatmul.mubr.f32.gmra.mrb[0].mxu0 %v924
  %v926 = vpop.f32.mrb[0].mxu0
  %v927 = vadd.f32 %v737, %v926
  %v928 = vpop.f32.mrb[0].mxu0
  %929 = vmatprep.mubr.f32.mxu0 0.0
  %v930 = vand.u32 %v176, 4294901760
  %v931 = vsub.f32 %v176, %v930
  %v932 = vand.u32 %v931, 4294901760
  %933 = vmatmul.mubr.f32.gmra.mrb[0].mxu0 %v932
  %v934 = vpop.f32.mrb[0].mxu0
  %v935 = vadd.f32 %v744, %v934
  %v936 = vpop.f32.mrb[0].mxu0
  %937 = vmatprep.mubr.f32.mxu0 0.0
  %v938 = vand.u32 %v179, 4294901760
  %v939 = vsub.f32 %v179, %v938
  %v940 = vand.u32 %v939, 4294901760
  %941 = vmatmul.mubr.f32.gmra.mrb[0].mxu0 %v940
  %v942 = vpop.f32.mrb[0].mxu0
  %v943 = vadd.f32 %v751, %v942
  %v944 = vpop.f32.mrb[0].mxu0
  %945 = vmatprep.mubr.f32.mxu0 0.0
  %v946 = vand.u32 %v182, 4294901760
  %v947 = vsub.f32 %v182, %v946
  %v948 = vand.u32 %v947, 4294901760
  %949 = vmatmul.mubr.f32.gmra.mrb[0].mxu0 %v948
  %v950 = vpop.f32.mrb[0].mxu0
  %v951 = vadd.f32 %v758, %v950
  %v952 = vpop.f32.mrb[0].mxu0
  %953 = vmatprep.mubr.f32.mxu0 0.0
  %v954 = vand.u32 %v185, 4294901760
  %v955 = vsub.f32 %v185, %v954
  %v956 = vand.u32 %v955, 4294901760
  %957 = vmatmul.mubr.f32.gmra.mrb[0].mxu0 %v956
  %v958 = vpop.f32.mrb[0].mxu0
  %v959 = vadd.f32 %v765, %v958
  %v960 = vpop.f32.mrb[0].mxu0
  %961 = vmatprep.mubr.f32.mxu0 0.0
  %v962 = vand.u32 %v188, 4294901760
  %v963 = vsub.f32 %v188, %v962
  %v964 = vand.u32 %v963, 4294901760
  %965 = vmatmul.mubr.f32.gmra.mrb[0].mxu0 %v964
  %v966 = vpop.f32.mrb[0].mxu0
  %v967 = vadd.f32 %v772, %v966
  %v968 = vpop.f32.mrb[0].mxu0
  %969 = vdwg.mxu0
  %970 = vmatprep.subr.mxu0 0.0
  %v971 = vand.u32 %v191, 4294901760
  %v972 = vsub.f32 %v191, %v971
  %v973 = vand.u32 %v972, 4294901760
  %974 = vmatpush1.xpose.msra.mxu0 %v973
  %975 = vmatprep.subr.mxu0 0.0
  %v976 = vand.u32 %v194, 4294901760
  %v977 = vsub.f32 %v194, %v976
  %v978 = vand.u32 %v977, 4294901760
  %979 = vmatpush1.xpose.msra.mxu0 %v978
  %980 = vmatprep.subr.mxu0 0.0
  %981 = vmatpush1.xpose.msra.mxu0 0.0
  %982 = vmatprep.subr.mxu0 0.0
  %983 = vmatpush1.xpose.msra.mxu0 0.0
  %984 = vmatprep.subr.mxu0 0.0
  %985 = vmatpush1.xpose.msra.mxu0 0.0
  %986 = vmatprep.subr.mxu0 0.0
  %987 = vmatpush1.xpose.msra.mxu0 0.0
  %988 = vmatprep.subr.mxu0 0.0
  %989 = vmatpush1.xpose.msra.mxu0 0.0
  %990 = vmatprep.subr.mxu0 0.0
  %991 = vmatpush1.xpose.msra.mxu0 0.0
  %992 = vmatprep.subr.mxu0 0.0
  %993 = vmatpush1.xpose.msra.mxu0 0.0
  %994 = vmatprep.subr.mxu0 0.0
  %995 = vmatpush1.xpose.msra.mxu0 0.0
  %996 = vmatprep.subr.mxu0 0.0
  %997 = vmatpush1.xpose.msra.mxu0 0.0
  %998 = vmatprep.subr.mxu0 0.0
  %999 = vmatpush1.xpose.msra.mxu0 0.0
  %1000 = vmatprep.subr.mxu0 0.0
  %1001 = vmatpush1.xpose.msra.mxu0 0.0
  %1002 = vmatprep.subr.mxu0 0.0
  %1003 = vmatpush1.xpose.msra.mxu0 0.0
  %1004 = vmatprep.subr.mxu0 0.0
  %1005 = vmatpush1.xpose.msra.mxu0 0.0
  %1006 = vmatprep.subr.mxu0 0.0
  %1007 = vmatpush1.xpose.msra.mxu0 0.0
  %1008 = vmatprep.subr.mxu0 0.0
  %1009 = vmatpush1.xpose.msra.mxu0 0.0
  %1010 = vmatprep.subr.mxu0 0.0
  %1011 = vmatpush1.xpose.msra.mxu0 0.0
  %1012 = vmatprep.subr.mxu0 0.0
  %1013 = vmatpush1.xpose.msra.mxu0 0.0
  %1014 = vmatprep.subr.mxu0 0.0
  %1015 = vmatpush1.xpose.msra.mxu0 0.0
  %1016 = vmatprep.subr.mxu0 0.0
  %1017 = vmatpush1.xpose.msra.mxu0 0.0
  %1018 = vmatprep.subr.mxu0 0.0
  %1019 = vmatpush1.xpose.msra.mxu0 0.0
  %1020 = vmatprep.subr.mxu0 0.0
  %1021 = vmatpush1.xpose.msra.mxu0 0.0
  %1022 = vmatprep.subr.mxu0 0.0
  %1023 = vmatpush1.xpose.msra.mxu0 0.0
  %1024 = vmatprep.subr.mxu0 0.0
  %1025 = vmatpush1.xpose.msra.mxu0 0.0
  %1026 = vmatprep.subr.mxu0 0.0
  %1027 = vmatpush1.xpose.msra.mxu0 0.0
  %1028 = vmatprep.subr.mxu0 0.0
  %1029 = vmatpush1.xpose.msra.mxu0 0.0
  %1030 = vmatprep.subr.mxu0 0.0
  %1031 = vmatpush1.xpose.msra.mxu0 0.0
  %1032 = vmatprep.subr.mxu0 0.0
  %1033 = vmatpush1.xpose.msra.mxu0 0.0
  %1034 = vmatprep.subr.mxu0 0.0
  %1035 = vmatpush1.xpose.msra.mxu0 0.0
  %1036 = vmatprep.subr.mxu0 0.0
  %1037 = vmatpush1.xpose.msra.mxu0 0.0
  %1038 = vmatprep.subr.mxu0 0.0
  %1039 = vmatpush1.xpose.msra.mxu0 0.0
  %1040 = vmatprep.mubr.f32.mxu0 0.0
  %v1041 = vand.u32 %v143, 4294901760
  %1042 = vmatmul.mubr.f32.gmra.mrb[0].mxu0 %v1041
  %v1043 = vpop.f32.mrb[0].mxu0
  %v1044 = vadd.f32 %v847, %v1043
  %v1045 = vpop.f32.mrb[0].mxu0
  %1046 = vmatprep.mubr.f32.mxu0 0.0
  %v1047 = vand.u32 %v146, 4294901760
  %1048 = vmatmul.mubr.f32.gmra.mrb[0].mxu0 %v1047
  %v1049 = vpop.f32.mrb[0].mxu0
  %v1050 = vadd.f32 %v855, %v1049
  %v1051 = vpop.f32.mrb[0].mxu0
  %1052 = vmatprep.mubr.f32.mxu0 0.0
  %v1053 = vand.u32 %v149, 4294901760
  %1054 = vmatmul.mubr.f32.gmra.mrb[0].mxu0 %v1053
  %v1055 = vpop.f32.mrb[0].mxu0
  %v1056 = vadd.f32 %v863, %v1055
  %v1057 = vpop.f32.mrb[0].mxu0
  %1058 = vmatprep.mubr.f32.mxu0 0.0
  %v1059 = vand.u32 %v152, 4294901760
  %1060 = vmatmul.mubr.f32.gmra.mrb[0].mxu0 %v1059
  %v1061 = vpop.f32.mrb[0].mxu0
  %v1062 = vadd.f32 %v871, %v1061
  %v1063 = vpop.f32.mrb[0].mxu0
  %1064 = vmatprep.mubr.f32.mxu0 0.0
  %v1065 = vand.u32 %v155, 4294901760
  %1066 = vmatmul.mubr.f32.gmra.mrb[0].mxu0 %v1065
  %v1067 = vpop.f32.mrb[0].mxu0
  %v1068 = vadd.f32 %v879, %v1067
  %v1069 = vpop.f32.mrb[0].mxu0
  %1070 = vmatprep.mubr.f32.mxu0 0.0
  %v1071 = vand.u32 %v158, 4294901760
  %1072 = vmatmul.mubr.f32.gmra.mrb[0].mxu0 %v1071
  %v1073 = vpop.f32.mrb[0].mxu0
  %v1074 = vadd.f32 %v887, %v1073
  %v1075 = vpop.f32.mrb[0].mxu0
  %1076 = vmatprep.mubr.f32.mxu0 0.0
  %v1077 = vand.u32 %v161, 4294901760
  %1078 = vmatmul.mubr.f32.gmra.mrb[0].mxu0 %v1077
  %v1079 = vpop.f32.mrb[0].mxu0
  %v1080 = vadd.f32 %v895, %v1079
  %v1081 = vpop.f32.mrb[0].mxu0
  %1082 = vmatprep.mubr.f32.mxu0 0.0
  %v1083 = vand.u32 %v164, 4294901760
  %1084 = vmatmul.mubr.f32.gmra.mrb[0].mxu0 %v1083
  %v1085 = vpop.f32.mrb[0].mxu0
  %v1086 = vadd.f32 %v903, %v1085
  %v1087 = vpop.f32.mrb[0].mxu0
  %1088 = vmatprep.mubr.f32.mxu0 0.0
  %v1089 = vand.u32 %v167, 4294901760
  %1090 = vmatmul.mubr.f32.gmra.mrb[0].mxu0 %v1089
  %v1091 = vpop.f32.mrb[0].mxu0
  %v1092 = vadd.f32 %v911, %v1091
  %v1093 = vpop.f32.mrb[0].mxu0
  %1094 = vmatprep.mubr.f32.mxu0 0.0
  %v1095 = vand.u32 %v170, 4294901760
  %1096 = vmatmul.mubr.f32.gmra.mrb[0].mxu0 %v1095
  %v1097 = vpop.f32.mrb[0].mxu0
  %v1098 = vadd.f32 %v919, %v1097
  %v1099 = vpop.f32.mrb[0].mxu0
  %1100 = vmatprep.mubr.f32.mxu0 0.0
  %v1101 = vand.u32 %v173, 4294901760
  %1102 = vmatmul.mubr.f32.gmra.mrb[0].mxu0 %v1101
  %v1103 = vpop.f32.mrb[0].mxu0
  %v1104 = vadd.f32 %v927, %v1103
  %v1105 = vpop.f32.mrb[0].mxu0
  %1106 = vmatprep.mubr.f32.mxu0 0.0
  %v1107 = vand.u32 %v176, 4294901760
  %1108 = vmatmul.mubr.f32.gmra.mrb[0].mxu0 %v1107
  %v1109 = vpop.f32.mrb[0].mxu0
  %v1110 = vadd.f32 %v935, %v1109
  %v1111 = vpop.f32.mrb[0].mxu0
  %1112 = vmatprep.mubr.f32.mxu0 0.0
  %v1113 = vand.u32 %v179, 4294901760
  %1114 = vmatmul.mubr.f32.gmra.mrb[0].mxu0 %v1113
  %v1115 = vpop.f32.mrb[0].mxu0
  %v1116 = vadd.f32 %v943, %v1115
  %v1117 = vpop.f32.mrb[0].mxu0
  %1118 = vmatprep.mubr.f32.mxu0 0.0
  %v1119 = vand.u32 %v182, 4294901760
  %1120 = vmatmul.mubr.f32.gmra.mrb[0].mxu0 %v1119
  %v1121 = vpop.f32.mrb[0].mxu0
  %v1122 = vadd.f32 %v951, %v1121
  %v1123 = vpop.f32.mrb[0].mxu0
  %1124 = vmatprep.mubr.f32.mxu0 0.0
  %v1125 = vand.u32 %v185, 4294901760
  %1126 = vmatmul.mubr.f32.gmra.mrb[0].mxu0 %v1125
  %v1127 = vpop.f32.mrb[0].mxu0
  %v1128 = vadd.f32 %v959, %v1127
  %v1129 = vpop.f32.mrb[0].mxu0
  %1130 = vmatprep.mubr.f32.mxu0 0.0
  %v1131 = vand.u32 %v188, 4294901760
  %1132 = vmatmul.mubr.f32.gmra.mrb[0].mxu0 %v1131
  %v1133 = vpop.f32.mrb[0].mxu0
  %v1134 = vadd.f32 %v967, %v1133
  %v1135 = vpop.f32.mrb[0].mxu0
  %1136 = vdwg.mxu0
  %1137 = vmatprep.subr.mxu0 0.0
  %v1138 = vand.u32 %v191, 4294901760
  %1139 = vmatpush1.xpose.msra.mxu0 %v1138
  %1140 = vmatprep.subr.mxu0 0.0
  %v1141 = vand.u32 %v194, 4294901760
  %1142 = vmatpush1.xpose.msra.mxu0 %v1141
  %1143 = vmatprep.subr.mxu0 0.0
  %1144 = vmatpush1.xpose.msra.mxu0 0.0
  %1145 = vmatprep.subr.mxu0 0.0
  %1146 = vmatpush1.xpose.msra.mxu0 0.0
  %1147 = vmatprep.subr.mxu0 0.0
  %1148 = vmatpush1.xpose.msra.mxu0 0.0
  %1149 = vmatprep.subr.mxu0 0.0
  %1150 = vmatpush1.xpose.msra.mxu0 0.0
  %1151 = vmatprep.subr.mxu0 0.0
  %1152 = vmatpush1.xpose.msra.mxu0 0.0
  %1153 = vmatprep.subr.mxu0 0.0
  %1154 = vmatpush1.xpose.msra.mxu0 0.0
  %1155 = vmatprep.subr.mxu0 0.0
  %1156 = vmatpush1.xpose.msra.mxu0 0.0
  %1157 = vmatprep.subr.mxu0 0.0
  %1158 = vmatpush1.xpose.msra.mxu0 0.0
  %1159 = vmatprep.subr.mxu0 0.0
  %1160 = vmatpush1.xpose.msra.mxu0 0.0
  %1161 = vmatprep.subr.mxu0 0.0
  %1162 = vmatpush1.xpose.msra.mxu0 0.0
  %1163 = vmatprep.subr.mxu0 0.0
  %1164 = vmatpush1.xpose.msra.mxu0 0.0
  %1165 = vmatprep.subr.mxu0 0.0
  %1166 = vmatpush1.xpose.msra.mxu0 0.0
  %1167 = vmatprep.subr.mxu0 0.0
  %1168 = vmatpush1.xpose.msra.mxu0 0.0
  %1169 = vmatprep.subr.mxu0 0.0
  %1170 = vmatpush1.xpose.msra.mxu0 0.0
  %1171 = vmatprep.subr.mxu0 0.0
  %1172 = vmatpush1.xpose.msra.mxu0 0.0
  %1173 = vmatprep.subr.mxu0 0.0
  %1174 = vmatpush1.xpose.msra.mxu0 0.0
  %1175 = vmatprep.subr.mxu0 0.0
  %1176 = vmatpush1.xpose.msra.mxu0 0.0
  %1177 = vmatprep.subr.mxu0 0.0
  %1178 = vmatpush1.xpose.msra.mxu0 0.0
  %1179 = vmatprep.subr.mxu0 0.0
  %1180 = vmatpush1.xpose.msra.mxu0 0.0
  %1181 = vmatprep.subr.mxu0 0.0
  %1182 = vmatpush1.xpose.msra.mxu0 0.0
  %1183 = vmatprep.subr.mxu0 0.0
  %1184 = vmatpush1.xpose.msra.mxu0 0.0
  %1185 = vmatprep.subr.mxu0 0.0
  %1186 = vmatpush1.xpose.msra.mxu0 0.0
  %1187 = vmatprep.subr.mxu0 0.0
  %1188 = vmatpush1.xpose.msra.mxu0 0.0
  %1189 = vmatprep.subr.mxu0 0.0
  %1190 = vmatpush1.xpose.msra.mxu0 0.0
  %1191 = vmatprep.subr.mxu0 0.0
  %1192 = vmatpush1.xpose.msra.mxu0 0.0
  %1193 = vmatprep.subr.mxu0 0.0
  %1194 = vmatpush1.xpose.msra.mxu0 0.0
  %1195 = vmatprep.subr.mxu0 0.0
  %1196 = vmatpush1.xpose.msra.mxu0 0.0
  %1197 = vmatprep.subr.mxu0 0.0
  %1198 = vmatpush1.xpose.msra.mxu0 0.0
  %1199 = vmatprep.subr.mxu0 0.0
  %1200 = vmatpush1.xpose.msra.mxu0 0.0
  %1201 = vmatprep.subr.mxu0 0.0
  %1202 = vmatpush1.xpose.msra.mxu0 0.0
  %1203 = vmatprep.mubr.f32.mxu0 0.0
  %v1204 = vand.u32 %v143, 4294901760
  %1205 = vmatmul.mubr.f32.gmra.mrb[0].mxu0 %v1204
  %v1206 = vpop.f32.mrb[0].mxu0
  %v1207 = vadd.f32 %v1044, %v1206
  %v1208 = vpop.f32.mrb[0].mxu0
  %1209 = vmatprep.mubr.f32.mxu0 0.0
  %v1210 = vand.u32 %v146, 4294901760
  %1211 = vmatmul.mubr.f32.gmra.mrb[0].mxu0 %v1210
  %v1212 = vpop.f32.mrb[0].mxu0
  %v1213 = vadd.f32 %v1050, %v1212
  %v1214 = vpop.f32.mrb[0].mxu0
  %1215 = vmatprep.mubr.f32.mxu0 0.0
  %v1216 = vand.u32 %v149, 4294901760
  %1217 = vmatmul.mubr.f32.gmra.mrb[0].mxu0 %v1216
  %v1218 = vpop.f32.mrb[0].mxu0
  %v1219 = vadd.f32 %v1056, %v1218
  %v1220 = vpop.f32.mrb[0].mxu0
  %1221 = vmatprep.mubr.f32.mxu0 0.0
  %v1222 = vand.u32 %v152, 4294901760
  %1223 = vmatmul.mubr.f32.gmra.mrb[0].mxu0 %v1222
  %v1224 = vpop.f32.mrb[0].mxu0
  %v1225 = vadd.f32 %v1062, %v1224
  %v1226 = vpop.f32.mrb[0].mxu0
  %1227 = vmatprep.mubr.f32.mxu0 0.0
  %v1228 = vand.u32 %v155, 4294901760
  %1229 = vmatmul.mubr.f32.gmra.mrb[0].mxu0 %v1228
  %v1230 = vpop.f32.mrb[0].mxu0
  %v1231 = vadd.f32 %v1068, %v1230
  %v1232 = vpop.f32.mrb[0].mxu0
  %1233 = vmatprep.mubr.f32.mxu0 0.0
  %v1234 = vand.u32 %v158, 4294901760
  %1235 = vmatmul.mubr.f32.gmra.mrb[0].mxu0 %v1234
  %v1236 = vpop.f32.mrb[0].mxu0
  %v1237 = vadd.f32 %v1074, %v1236
  %v1238 = vpop.f32.mrb[0].mxu0
  %1239 = vmatprep.mubr.f32.mxu0 0.0
  %v1240 = vand.u32 %v161, 4294901760
  %1241 = vmatmul.mubr.f32.gmra.mrb[0].mxu0 %v1240
  %v1242 = vpop.f32.mrb[0].mxu0
  %v1243 = vadd.f32 %v1080, %v1242
  %v1244 = vpop.f32.mrb[0].mxu0
  %1245 = vmatprep.mubr.f32.mxu0 0.0
  %v1246 = vand.u32 %v164, 4294901760
  %1247 = vmatmul.mubr.f32.gmra.mrb[0].mxu0 %v1246
  %v1248 = vpop.f32.mrb[0].mxu0
  %v1249 = vadd.f32 %v1086, %v1248
  %v1250 = vpop.f32.mrb[0].mxu0
  %1251 = vmatprep.mubr.f32.mxu0 0.0
  %v1252 = vand.u32 %v167, 4294901760
  %1253 = vmatmul.mubr.f32.gmra.mrb[0].mxu0 %v1252
  %v1254 = vpop.f32.mrb[0].mxu0
  %v1255 = vadd.f32 %v1092, %v1254
  %v1256 = vpop.f32.mrb[0].mxu0
  %1257 = vmatprep.mubr.f32.mxu0 0.0
  %v1258 = vand.u32 %v170, 4294901760
  %1259 = vmatmul.mubr.f32.gmra.mrb[0].mxu0 %v1258
  %v1260 = vpop.f32.mrb[0].mxu0
  %v1261 = vadd.f32 %v1098, %v1260
  %v1262 = vpop.f32.mrb[0].mxu0
  %1263 = vmatprep.mubr.f32.mxu0 0.0
  %v1264 = vand.u32 %v173, 4294901760
  %1265 = vmatmul.mubr.f32.gmra.mrb[0].mxu0 %v1264
  %v1266 = vpop.f32.mrb[0].mxu0
  %v1267 = vadd.f32 %v1104, %v1266
  %v1268 = vpop.f32.mrb[0].mxu0
  %1269 = vmatprep.mubr.f32.mxu0 0.0
  %v1270 = vand.u32 %v176, 4294901760
  %1271 = vmatmul.mubr.f32.gmra.mrb[0].mxu0 %v1270
  %v1272 = vpop.f32.mrb[0].mxu0
  %v1273 = vadd.f32 %v1110, %v1272
  %v1274 = vpop.f32.mrb[0].mxu0
  %1275 = vmatprep.mubr.f32.mxu0 0.0
  %v1276 = vand.u32 %v179, 4294901760
  %1277 = vmatmul.mubr.f32.gmra.mrb[0].mxu0 %v1276
  %v1278 = vpop.f32.mrb[0].mxu0
  %v1279 = vadd.f32 %v1116, %v1278
  %v1280 = vpop.f32.mrb[0].mxu0
  %1281 = vmatprep.mubr.f32.mxu0 0.0
  %v1282 = vand.u32 %v182, 4294901760
  %1283 = vmatmul.mubr.f32.gmra.mrb[0].mxu0 %v1282
  %v1284 = vpop.f32.mrb[0].mxu0
  %v1285 = vadd.f32 %v1122, %v1284
  %v1286 = vpop.f32.mrb[0].mxu0
  %1287 = vmatprep.mubr.f32.mxu0 0.0
  %v1288 = vand.u32 %v185, 4294901760
  %1289 = vmatmul.mubr.f32.gmra.mrb[0].mxu0 %v1288
  %v1290 = vpop.f32.mrb[0].mxu0
  %v1291 = vadd.f32 %v1128, %v1290
  %v1292 = vpop.f32.mrb[0].mxu0
  %1293 = vmatprep.mubr.f32.mxu0 0.0
  %v1294 = vand.u32 %v188, 4294901760
  %1295 = vmatmul.mubr.f32.gmra.mrb[0].mxu0 %v1294
  %v1296 = vpop.f32.mrb[0].mxu0
  %v1297 = vadd.f32 %v1134, %v1296
  %v1298 = vpop.f32.mrb[0].mxu0
  %1299 = vdwg.mxu0
  %v1300 = vsel %vm141, %v1207, 0.0
  %v1301 = vsel %vm141, %v1213, 0.0
  %v1302 = vadd.f32 %v1300, %v1301
  %v1303 = vsel %vm141, %v1219, 0.0
  %v1304 = vadd.f32 %v1302, %v1303
  %v1305 = vsel %vm141, %v1225, 0.0
  %v1306 = vadd.f32 %v1304, %v1305
  %v1307 = vsel %vm141, %v1231, 0.0
  %v1308 = vadd.f32 %v1306, %v1307
  %v1309 = vsel %vm141, %v1237, 0.0
  %v1310 = vadd.f32 %v1308, %v1309
  %v1311 = vsel %vm141, %v1243, 0.0
  %v1312 = vadd.f32 %v1310, %v1311
  %v1313 = vsel %vm141, %v1249, 0.0
  %v1314 = vadd.f32 %v1312, %v1313
  %v1315 = vsel %vm141, %v1255, 0.0
  %v1316 = vadd.f32 %v1314, %v1315
  %v1317 = vsel %vm141, %v1261, 0.0
  %v1318 = vadd.f32 %v1316, %v1317
  %v1319 = vsel %vm141, %v1267, 0.0
  %v1320 = vadd.f32 %v1318, %v1319
  %v1321 = vsel %vm141, %v1273, 0.0
  %v1322 = vadd.f32 %v1320, %v1321
  %v1323 = vsel %vm141, %v1279, 0.0
  %v1324 = vadd.f32 %v1322, %v1323
  %v1325 = vsel %vm141, %v1285, 0.0
  %v1326 = vadd.f32 %v1324, %v1325
  %v1327 = vsel %vm141, %v1291, 0.0
  %v1328 = vadd.f32 %v1326, %v1327
  %v1329 = vsel %vm141, %v1297, 0.0
  %v1330 = vadd.f32 %v1328, %v1329
  %v1331 = vrot.slane %v1330, 4
  %v1332 = vadd.f32 %v1330, %v1331
  %v1333 = vrot.slane %v1332, 2
  %v1334 = vadd.f32 %v1332, %v1333
  %v1335 = vrot.slane %v1334, 1
  %v1336 = vadd.f32 %v1334, %v1335
  %v1337 = vmul.f32 %v1336, 0.0078125
  %v1338 = vmul.f32 %v1207, %v1207
  %v1339 = vmul.f32 %v1213, %v1213
  %v1340 = vmul.f32 %v1219, %v1219
  %v1341 = vmul.f32 %v1225, %v1225
  %v1342 = vmul.f32 %v1231, %v1231
  %v1343 = vmul.f32 %v1237, %v1237
  %v1344 = vmul.f32 %v1243, %v1243
  %v1345 = vmul.f32 %v1249, %v1249
  %v1346 = vmul.f32 %v1255, %v1255
  %v1347 = vmul.f32 %v1261, %v1261
  %v1348 = vmul.f32 %v1267, %v1267
  %v1349 = vmul.f32 %v1273, %v1273
  %v1350 = vmul.f32 %v1279, %v1279
  %v1351 = vmul.f32 %v1285, %v1285
  %v1352 = vmul.f32 %v1291, %v1291
  %v1353 = vmul.f32 %v1297, %v1297
  %v1354 = vsel %vm141, %v1338, 0.0
  %v1355 = vsel %vm141, %v1339, 0.0
  %v1356 = vadd.f32 %v1354, %v1355
  %v1357 = vsel %vm141, %v1340, 0.0
  %v1358 = vadd.f32 %v1356, %v1357
  %v1359 = vsel %vm141, %v1341, 0.0
  %v1360 = vadd.f32 %v1358, %v1359
  %v1361 = vsel %vm141, %v1342, 0.0
  %v1362 = vadd.f32 %v1360, %v1361
  %v1363 = vsel %vm141, %v1343, 0.0
  %v1364 = vadd.f32 %v1362, %v1363
  %v1365 = vsel %vm141, %v1344, 0.0
  %v1366 = vadd.f32 %v1364, %v1365
  %v1367 = vsel %vm141, %v1345, 0.0
  %v1368 = vadd.f32 %v1366, %v1367
  %v1369 = vsel %vm141, %v1346, 0.0
  %v1370 = vadd.f32 %v1368, %v1369
  %v1371 = vsel %vm141, %v1347, 0.0
  %v1372 = vadd.f32 %v1370, %v1371
  %v1373 = vsel %vm141, %v1348, 0.0
  %v1374 = vadd.f32 %v1372, %v1373
  %v1375 = vsel %vm141, %v1349, 0.0
  %v1376 = vadd.f32 %v1374, %v1375
  %v1377 = vsel %vm141, %v1350, 0.0
  %v1378 = vadd.f32 %v1376, %v1377
  %v1379 = vsel %vm141, %v1351, 0.0
  %v1380 = vadd.f32 %v1378, %v1379
  %v1381 = vsel %vm141, %v1352, 0.0
  %v1382 = vadd.f32 %v1380, %v1381
  %v1383 = vsel %vm141, %v1353, 0.0
  %v1384 = vadd.f32 %v1382, %v1383
  %v1385 = vrot.slane %v1384, 4
  %v1386 = vadd.f32 %v1384, %v1385
  %v1387 = vrot.slane %v1386, 2
  %v1388 = vadd.f32 %v1386, %v1387
  %v1389 = vrot.slane %v1388, 1
  %v1390 = vadd.f32 %v1388, %v1389
  %v1391 = vmul.f32 %v1390, 0.0078125
  %v1392 = vmul.f32 %v1337, %v1337
  %v1393 = vsub.f32 %v1391, %v1392
  %v1394 = vmax.f32 %v1393, 0.0
  %v1395 = vsub.f32 %v1207, %v1337
  %v1396 = vsub.f32 %v1213, %v1337
  %v1397 = vsub.f32 %v1219, %v1337
  %v1398 = vsub.f32 %v1225, %v1337
  %v1399 = vsub.f32 %v1231, %v1337
  %v1400 = vsub.f32 %v1237, %v1337
  %v1401 = vsub.f32 %v1243, %v1337
  %v1402 = vsub.f32 %v1249, %v1337
  %v1403 = vsub.f32 %v1255, %v1337
  %v1404 = vsub.f32 %v1261, %v1337
  %v1405 = vsub.f32 %v1267, %v1337
  %v1406 = vsub.f32 %v1273, %v1337
  %v1407 = vsub.f32 %v1279, %v1337
  %v1408 = vsub.f32 %v1285, %v1337
  %v1409 = vsub.f32 %v1291, %v1337
  %v1410 = vsub.f32 %v1297, %v1337
  %v1411 = vadd.f32 %v1394, 1e-05
  %v1412 = vrsqrt.pop %v1411
  %v1413 = vmul.f32 %v1395, %v1412
  %v1414 = vmul.f32 %v1396, %v1412
  %v1415 = vmul.f32 %v1397, %v1412
  %v1416 = vmul.f32 %v1398, %v1412
  %v1417 = vmul.f32 %v1399, %v1412
  %v1418 = vmul.f32 %v1400, %v1412
  %v1419 = vmul.f32 %v1401, %v1412
  %v1420 = vmul.f32 %v1402, %v1412
  %v1421 = vmul.f32 %v1403, %v1412
  %v1422 = vmul.f32 %v1404, %v1412
  %v1423 = vmul.f32 %v1405, %v1412
  %v1424 = vmul.f32 %v1406, %v1412
  %v1425 = vmul.f32 %v1407, %v1412
  %v1426 = vmul.f32 %v1408, %v1412
  %v1427 = vmul.f32 %v1409, %v1412
  %v1428 = vmul.f32 %v1410, %v1412
  %v1429 = vmul.f32 %v1413, 0.2
  %v1430 = vmul.f32 %v1414, 0.2
  %v1431 = vmul.f32 %v1415, 0.2
  %v1432 = vmul.f32 %v1416, 0.2
  %v1433 = vmul.f32 %v1417, 0.2
  %v1434 = vmul.f32 %v1418, 0.2
  %v1435 = vmul.f32 %v1419, 0.2
  %v1436 = vmul.f32 %v1420, 0.2
  %v1437 = vmul.f32 %v1421, 0.2
  %v1438 = vmul.f32 %v1422, 0.2
  %v1439 = vmul.f32 %v1423, 0.2
  %v1440 = vmul.f32 %v1424, 0.2
  %v1441 = vmul.f32 %v1425, 0.2
  %v1442 = vmul.f32 %v1426, 0.2
  %v1443 = vmul.f32 %v1427, 0.2
  %v1444 = vmul.f32 %v1428, 0.2
  %v1445 = vmax.f32 %v1413, %v1429
  %v1446 = vmax.f32 %v1414, %v1430
  %v1447 = vmax.f32 %v1415, %v1431
  %v1448 = vmax.f32 %v1416, %v1432
  %v1449 = vmax.f32 %v1417, %v1433
  %v1450 = vmax.f32 %v1418, %v1434
  %v1451 = vmax.f32 %v1419, %v1435
  %v1452 = vmax.f32 %v1420, %v1436
  %v1453 = vmax.f32 %v1421, %v1437
  %v1454 = vmax.f32 %v1422, %v1438
  %v1455 = vmax.f32 %v1423, %v1439
  %v1456 = vmax.f32 %v1424, %v1440
  %v1457 = vmax.f32 %v1425, %v1441
  %v1458 = vmax.f32 %v1426, %v1442
  %v1459 = vmax.f32 %v1427, %v1443
  %v1460 = vmax.f32 %v1428, %v1444
  %v1461 = vld [vmem:[%s3] sm:$0xff]
  %v1462 = vld [vmem:[%s3 + $0x8] sm:$0xff]
  %v1463 = vld [vmem:[%s3 + $0x10] sm:$0xff]
  %v1464 = vld [vmem:[%s3 + $0x18] sm:$0xff]
  %v1465 = vld [vmem:[%s3 + $0x20] sm:$0xff]
  %v1466 = vld [vmem:[%s3 + $0x28] sm:$0xff]
  %v1467 = vld [vmem:[%s3 + $0x30] sm:$0xff]
  %v1468 = vld [vmem:[%s3 + $0x38] sm:$0xff]
  %v1469 = vld [vmem:[%s4] sm:$0xff]
  %v1470 = vld [vmem:[%s4 + $0x8] sm:$0xff]
  %v1471 = vld [vmem:[%s4 + $0x10] sm:$0xff]
  %v1472 = vld [vmem:[%s4 + $0x18] sm:$0xff]
  %v1473 = vld [vmem:[%s4 + $0x20] sm:$0xff]
  %v1474 = vld [vmem:[%s4 + $0x28] sm:$0xff]
  %v1475 = vld [vmem:[%s4 + $0x30] sm:$0xff]
  %v1476 = vld [vmem:[%s4 + $0x38] sm:$0xff]
  %1478 = vset.pattern.permute.xlu0 0
  %1479 = vperm.xlu0 %1478, %v1469
  %v1480 = vpop.permute.xlu0 %1479
  %1483 = vset.pattern.permute.xlu0 0
  %1484 = vperm.xlu0 %1483, %v1470
  %v1485 = vpop.permute.xlu0 %1484
  %1488 = vset.pattern.permute.xlu0 0
  %1489 = vperm.xlu0 %1488, %v1471
  %v1490 = vpop.permute.xlu0 %1489
  %1493 = vset.pattern.permute.xlu0 0
  %1494 = vperm.xlu0 %1493, %v1472
  %v1495 = vpop.permute.xlu0 %1494
  %1498 = vset.pattern.permute.xlu0 0
  %1499 = vperm.xlu0 %1498, %v1473
  %v1500 = vpop.permute.xlu0 %1499
  %1503 = vset.pattern.permute.xlu0 0
  %1504 = vperm.xlu0 %1503, %v1474
  %v1505 = vpop.permute.xlu0 %1504
  %1508 = vset.pattern.permute.xlu0 0
  %1509 = vperm.xlu0 %1508, %v1475
  %v1510 = vpop.permute.xlu0 %1509
  %1513 = vset.pattern.permute.xlu0 0
  %1514 = vperm.xlu0 %1513, %v1476
  %v1515 = vpop.permute.xlu0 %1514
  %1517 = vmatprep.subr.mxu0 0.0
  %v1518 = vand.u32 %v1445, 4294901760
  %1519 = vmatpush1.msra.mxu0 %v1518
  %1520 = vmatprep.subr.mxu0 0.0
  %v1521 = vand.u32 %v1446, 4294901760
  %1522 = vmatpush1.msra.mxu0 %v1521
  %1523 = vmatprep.subr.mxu0 0.0
  %v1524 = vand.u32 %v1447, 4294901760
  %1525 = vmatpush1.msra.mxu0 %v1524
  %1526 = vmatprep.subr.mxu0 0.0
  %v1527 = vand.u32 %v1448, 4294901760
  %1528 = vmatpush1.msra.mxu0 %v1527
  %1529 = vmatprep.subr.mxu0 0.0
  %v1530 = vand.u32 %v1449, 4294901760
  %1531 = vmatpush1.msra.mxu0 %v1530
  %1532 = vmatprep.subr.mxu0 0.0
  %v1533 = vand.u32 %v1450, 4294901760
  %1534 = vmatpush1.msra.mxu0 %v1533
  %1535 = vmatprep.subr.mxu0 0.0
  %v1536 = vand.u32 %v1451, 4294901760
  %1537 = vmatpush1.msra.mxu0 %v1536
  %1538 = vmatprep.subr.mxu0 0.0
  %v1539 = vand.u32 %v1452, 4294901760
  %1540 = vmatpush1.msra.mxu0 %v1539
  %1541 = vmatprep.subr.mxu0 0.0
  %v1542 = vand.u32 %v1453, 4294901760
  %1543 = vmatpush1.msra.mxu0 %v1542
  %1544 = vmatprep.subr.mxu0 0.0
  %v1545 = vand.u32 %v1454, 4294901760
  %1546 = vmatpush1.msra.mxu0 %v1545
  %1547 = vmatprep.subr.mxu0 0.0
  %v1548 = vand.u32 %v1455, 4294901760
  %1549 = vmatpush1.msra.mxu0 %v1548
  %1550 = vmatprep.subr.mxu0 0.0
  %v1551 = vand.u32 %v1456, 4294901760
  %1552 = vmatpush1.msra.mxu0 %v1551
  %1553 = vmatprep.subr.mxu0 0.0
  %v1554 = vand.u32 %v1457, 4294901760
  %1555 = vmatpush1.msra.mxu0 %v1554
  %1556 = vmatprep.subr.mxu0 0.0
  %v1557 = vand.u32 %v1458, 4294901760
  %1558 = vmatpush1.msra.mxu0 %v1557
  %1559 = vmatprep.subr.mxu0 0.0
  %v1560 = vand.u32 %v1459, 4294901760
  %1561 = vmatpush1.msra.mxu0 %v1560
  %1562 = vmatprep.subr.mxu0 0.0
  %v1563 = vand.u32 %v1460, 4294901760
  %1564 = vmatpush1.msra.mxu0 %v1563
  %1565 = vmatprep.subr.mxu0 0.0
  %1566 = vmatpush1.msra.mxu0 0.0
  %1567 = vmatprep.subr.mxu0 0.0
  %1568 = vmatpush1.msra.mxu0 0.0
  %1569 = vmatprep.subr.mxu0 0.0
  %1570 = vmatpush1.msra.mxu0 0.0
  %1571 = vmatprep.subr.mxu0 0.0
  %1572 = vmatpush1.msra.mxu0 0.0
  %1573 = vmatprep.subr.mxu0 0.0
  %1574 = vmatpush1.msra.mxu0 0.0
  %1575 = vmatprep.subr.mxu0 0.0
  %1576 = vmatpush1.msra.mxu0 0.0
  %1577 = vmatprep.subr.mxu0 0.0
  %1578 = vmatpush1.msra.mxu0 0.0
  %1579 = vmatprep.subr.mxu0 0.0
  %1580 = vmatpush1.msra.mxu0 0.0
  %1581 = vmatprep.subr.mxu0 0.0
  %1582 = vmatpush1.msra.mxu0 0.0
  %1583 = vmatprep.subr.mxu0 0.0
  %1584 = vmatpush1.msra.mxu0 0.0
  %1585 = vmatprep.subr.mxu0 0.0
  %1586 = vmatpush1.msra.mxu0 0.0
  %1587 = vmatprep.subr.mxu0 0.0
  %1588 = vmatpush1.msra.mxu0 0.0
  %1589 = vmatprep.subr.mxu0 0.0
  %1590 = vmatpush1.msra.mxu0 0.0
  %1591 = vmatprep.subr.mxu0 0.0
  %1592 = vmatpush1.msra.mxu0 0.0
  %1593 = vmatprep.subr.mxu0 0.0
  %1594 = vmatpush1.msra.mxu0 0.0
  %1595 = vmatprep.subr.mxu0 0.0
  %1596 = vmatpush1.msra.mxu0 0.0
  %1597 = vmatprep.mubr.f32.mxu0 0.0
  %v1598 = vand.u32 %v1461, 4294901760
  %v1599 = vsub.f32 %v1461, %v1598
  %v1600 = vand.u32 %v1599, 4294901760
  %v1601 = vsub.f32 %v1599, %v1600
  %v1602 = vand.u32 %v1601, 4294901760
  %1603 = vmatmul.mubr.f32.gmra.mrb[0].mxu0 %v1602
  %v1604 = vpop.f32.mrb[0].mxu0
  %v1605 = vadd.f32 %v1480, %v1604
  %v1606 = vpop.f32.mrb[0].mxu0
  %1607 = vmatprep.mubr.f32.mxu0 0.0
  %v1608 = vand.u32 %v1462, 4294901760
  %v1609 = vsub.f32 %v1462, %v1608
  %v1610 = vand.u32 %v1609, 4294901760
  %v1611 = vsub.f32 %v1609, %v1610
  %v1612 = vand.u32 %v1611, 4294901760
  %1613 = vmatmul.mubr.f32.gmra.mrb[0].mxu0 %v1612
  %v1614 = vpop.f32.mrb[0].mxu0
  %v1615 = vadd.f32 %v1485, %v1614
  %v1616 = vpop.f32.mrb[0].mxu0
  %1617 = vmatprep.mubr.f32.mxu0 0.0
  %v1618 = vand.u32 %v1463, 4294901760
  %v1619 = vsub.f32 %v1463, %v1618
  %v1620 = vand.u32 %v1619, 4294901760
  %v1621 = vsub.f32 %v1619, %v1620
  %v1622 = vand.u32 %v1621, 4294901760
  %1623 = vmatmul.mubr.f32.gmra.mrb[0].mxu0 %v1622
  %v1624 = vpop.f32.mrb[0].mxu0
  %v1625 = vadd.f32 %v1490, %v1624
  %v1626 = vpop.f32.mrb[0].mxu0
  %1627 = vmatprep.mubr.f32.mxu0 0.0
  %v1628 = vand.u32 %v1464, 4294901760
  %v1629 = vsub.f32 %v1464, %v1628
  %v1630 = vand.u32 %v1629, 4294901760
  %v1631 = vsub.f32 %v1629, %v1630
  %v1632 = vand.u32 %v1631, 4294901760
  %1633 = vmatmul.mubr.f32.gmra.mrb[0].mxu0 %v1632
  %v1634 = vpop.f32.mrb[0].mxu0
  %v1635 = vadd.f32 %v1495, %v1634
  %v1636 = vpop.f32.mrb[0].mxu0
  %1637 = vmatprep.mubr.f32.mxu0 0.0
  %v1638 = vand.u32 %v1465, 4294901760
  %v1639 = vsub.f32 %v1465, %v1638
  %v1640 = vand.u32 %v1639, 4294901760
  %v1641 = vsub.f32 %v1639, %v1640
  %v1642 = vand.u32 %v1641, 4294901760
  %1643 = vmatmul.mubr.f32.gmra.mrb[0].mxu0 %v1642
  %v1644 = vpop.f32.mrb[0].mxu0
  %v1645 = vadd.f32 %v1500, %v1644
  %v1646 = vpop.f32.mrb[0].mxu0
  %1647 = vmatprep.mubr.f32.mxu0 0.0
  %v1648 = vand.u32 %v1466, 4294901760
  %v1649 = vsub.f32 %v1466, %v1648
  %v1650 = vand.u32 %v1649, 4294901760
  %v1651 = vsub.f32 %v1649, %v1650
  %v1652 = vand.u32 %v1651, 4294901760
  %1653 = vmatmul.mubr.f32.gmra.mrb[0].mxu0 %v1652
  %v1654 = vpop.f32.mrb[0].mxu0
  %v1655 = vadd.f32 %v1505, %v1654
  %v1656 = vpop.f32.mrb[0].mxu0
  %1657 = vmatprep.mubr.f32.mxu0 0.0
  %v1658 = vand.u32 %v1467, 4294901760
  %v1659 = vsub.f32 %v1467, %v1658
  %v1660 = vand.u32 %v1659, 4294901760
  %v1661 = vsub.f32 %v1659, %v1660
  %v1662 = vand.u32 %v1661, 4294901760
  %1663 = vmatmul.mubr.f32.gmra.mrb[0].mxu0 %v1662
  %v1664 = vpop.f32.mrb[0].mxu0
  %v1665 = vadd.f32 %v1510, %v1664
  %v1666 = vpop.f32.mrb[0].mxu0
  %1667 = vmatprep.mubr.f32.mxu0 0.0
  %v1668 = vand.u32 %v1468, 4294901760
  %v1669 = vsub.f32 %v1468, %v1668
  %v1670 = vand.u32 %v1669, 4294901760
  %v1671 = vsub.f32 %v1669, %v1670
  %v1672 = vand.u32 %v1671, 4294901760
  %1673 = vmatmul.mubr.f32.gmra.mrb[0].mxu0 %v1672
  %v1674 = vpop.f32.mrb[0].mxu0
  %v1675 = vadd.f32 %v1515, %v1674
  %v1676 = vpop.f32.mrb[0].mxu0
  %1677 = vdwg.mxu0
  %1678 = vmatprep.subr.mxu0 0.0
  %v1679 = vand.u32 %v1445, 4294901760
  %v1680 = vsub.f32 %v1445, %v1679
  %v1681 = vand.u32 %v1680, 4294901760
  %v1682 = vsub.f32 %v1680, %v1681
  %v1683 = vand.u32 %v1682, 4294901760
  %1684 = vmatpush1.msra.mxu0 %v1683
  %1685 = vmatprep.subr.mxu0 0.0
  %v1686 = vand.u32 %v1446, 4294901760
  %v1687 = vsub.f32 %v1446, %v1686
  %v1688 = vand.u32 %v1687, 4294901760
  %v1689 = vsub.f32 %v1687, %v1688
  %v1690 = vand.u32 %v1689, 4294901760
  %1691 = vmatpush1.msra.mxu0 %v1690
  %1692 = vmatprep.subr.mxu0 0.0
  %v1693 = vand.u32 %v1447, 4294901760
  %v1694 = vsub.f32 %v1447, %v1693
  %v1695 = vand.u32 %v1694, 4294901760
  %v1696 = vsub.f32 %v1694, %v1695
  %v1697 = vand.u32 %v1696, 4294901760
  %1698 = vmatpush1.msra.mxu0 %v1697
  %1699 = vmatprep.subr.mxu0 0.0
  %v1700 = vand.u32 %v1448, 4294901760
  %v1701 = vsub.f32 %v1448, %v1700
  %v1702 = vand.u32 %v1701, 4294901760
  %v1703 = vsub.f32 %v1701, %v1702
  %v1704 = vand.u32 %v1703, 4294901760
  %1705 = vmatpush1.msra.mxu0 %v1704
  %1706 = vmatprep.subr.mxu0 0.0
  %v1707 = vand.u32 %v1449, 4294901760
  %v1708 = vsub.f32 %v1449, %v1707
  %v1709 = vand.u32 %v1708, 4294901760
  %v1710 = vsub.f32 %v1708, %v1709
  %v1711 = vand.u32 %v1710, 4294901760
  %1712 = vmatpush1.msra.mxu0 %v1711
  %1713 = vmatprep.subr.mxu0 0.0
  %v1714 = vand.u32 %v1450, 4294901760
  %v1715 = vsub.f32 %v1450, %v1714
  %v1716 = vand.u32 %v1715, 4294901760
  %v1717 = vsub.f32 %v1715, %v1716
  %v1718 = vand.u32 %v1717, 4294901760
  %1719 = vmatpush1.msra.mxu0 %v1718
  %1720 = vmatprep.subr.mxu0 0.0
  %v1721 = vand.u32 %v1451, 4294901760
  %v1722 = vsub.f32 %v1451, %v1721
  %v1723 = vand.u32 %v1722, 4294901760
  %v1724 = vsub.f32 %v1722, %v1723
  %v1725 = vand.u32 %v1724, 4294901760
  %1726 = vmatpush1.msra.mxu0 %v1725
  %1727 = vmatprep.subr.mxu0 0.0
  %v1728 = vand.u32 %v1452, 4294901760
  %v1729 = vsub.f32 %v1452, %v1728
  %v1730 = vand.u32 %v1729, 4294901760
  %v1731 = vsub.f32 %v1729, %v1730
  %v1732 = vand.u32 %v1731, 4294901760
  %1733 = vmatpush1.msra.mxu0 %v1732
  %1734 = vmatprep.subr.mxu0 0.0
  %v1735 = vand.u32 %v1453, 4294901760
  %v1736 = vsub.f32 %v1453, %v1735
  %v1737 = vand.u32 %v1736, 4294901760
  %v1738 = vsub.f32 %v1736, %v1737
  %v1739 = vand.u32 %v1738, 4294901760
  %1740 = vmatpush1.msra.mxu0 %v1739
  %1741 = vmatprep.subr.mxu0 0.0
  %v1742 = vand.u32 %v1454, 4294901760
  %v1743 = vsub.f32 %v1454, %v1742
  %v1744 = vand.u32 %v1743, 4294901760
  %v1745 = vsub.f32 %v1743, %v1744
  %v1746 = vand.u32 %v1745, 4294901760
  %1747 = vmatpush1.msra.mxu0 %v1746
  %1748 = vmatprep.subr.mxu0 0.0
  %v1749 = vand.u32 %v1455, 4294901760
  %v1750 = vsub.f32 %v1455, %v1749
  %v1751 = vand.u32 %v1750, 4294901760
  %v1752 = vsub.f32 %v1750, %v1751
  %v1753 = vand.u32 %v1752, 4294901760
  %1754 = vmatpush1.msra.mxu0 %v1753
  %1755 = vmatprep.subr.mxu0 0.0
  %v1756 = vand.u32 %v1456, 4294901760
  %v1757 = vsub.f32 %v1456, %v1756
  %v1758 = vand.u32 %v1757, 4294901760
  %v1759 = vsub.f32 %v1757, %v1758
  %v1760 = vand.u32 %v1759, 4294901760
  %1761 = vmatpush1.msra.mxu0 %v1760
  %1762 = vmatprep.subr.mxu0 0.0
  %v1763 = vand.u32 %v1457, 4294901760
  %v1764 = vsub.f32 %v1457, %v1763
  %v1765 = vand.u32 %v1764, 4294901760
  %v1766 = vsub.f32 %v1764, %v1765
  %v1767 = vand.u32 %v1766, 4294901760
  %1768 = vmatpush1.msra.mxu0 %v1767
  %1769 = vmatprep.subr.mxu0 0.0
  %v1770 = vand.u32 %v1458, 4294901760
  %v1771 = vsub.f32 %v1458, %v1770
  %v1772 = vand.u32 %v1771, 4294901760
  %v1773 = vsub.f32 %v1771, %v1772
  %v1774 = vand.u32 %v1773, 4294901760
  %1775 = vmatpush1.msra.mxu0 %v1774
  %1776 = vmatprep.subr.mxu0 0.0
  %v1777 = vand.u32 %v1459, 4294901760
  %v1778 = vsub.f32 %v1459, %v1777
  %v1779 = vand.u32 %v1778, 4294901760
  %v1780 = vsub.f32 %v1778, %v1779
  %v1781 = vand.u32 %v1780, 4294901760
  %1782 = vmatpush1.msra.mxu0 %v1781
  %1783 = vmatprep.subr.mxu0 0.0
  %v1784 = vand.u32 %v1460, 4294901760
  %v1785 = vsub.f32 %v1460, %v1784
  %v1786 = vand.u32 %v1785, 4294901760
  %v1787 = vsub.f32 %v1785, %v1786
  %v1788 = vand.u32 %v1787, 4294901760
  %1789 = vmatpush1.msra.mxu0 %v1788
  %1790 = vmatprep.subr.mxu0 0.0
  %1791 = vmatpush1.msra.mxu0 0.0
  %1792 = vmatprep.subr.mxu0 0.0
  %1793 = vmatpush1.msra.mxu0 0.0
  %1794 = vmatprep.subr.mxu0 0.0
  %1795 = vmatpush1.msra.mxu0 0.0
  %1796 = vmatprep.subr.mxu0 0.0
  %1797 = vmatpush1.msra.mxu0 0.0
  %1798 = vmatprep.subr.mxu0 0.0
  %1799 = vmatpush1.msra.mxu0 0.0
  %1800 = vmatprep.subr.mxu0 0.0
  %1801 = vmatpush1.msra.mxu0 0.0
  %1802 = vmatprep.subr.mxu0 0.0
  %1803 = vmatpush1.msra.mxu0 0.0
  %1804 = vmatprep.subr.mxu0 0.0
  %1805 = vmatpush1.msra.mxu0 0.0
  %1806 = vmatprep.subr.mxu0 0.0
  %1807 = vmatpush1.msra.mxu0 0.0
  %1808 = vmatprep.subr.mxu0 0.0
  %1809 = vmatpush1.msra.mxu0 0.0
  %1810 = vmatprep.subr.mxu0 0.0
  %1811 = vmatpush1.msra.mxu0 0.0
  %1812 = vmatprep.subr.mxu0 0.0
  %1813 = vmatpush1.msra.mxu0 0.0
  %1814 = vmatprep.subr.mxu0 0.0
  %1815 = vmatpush1.msra.mxu0 0.0
  %1816 = vmatprep.subr.mxu0 0.0
  %1817 = vmatpush1.msra.mxu0 0.0
  %1818 = vmatprep.subr.mxu0 0.0
  %1819 = vmatpush1.msra.mxu0 0.0
  %1820 = vmatprep.subr.mxu0 0.0
  %1821 = vmatpush1.msra.mxu0 0.0
  %1822 = vmatprep.mubr.f32.mxu0 0.0
  %v1823 = vand.u32 %v1461, 4294901760
  %1824 = vmatmul.mubr.f32.gmra.mrb[0].mxu0 %v1823
  %v1825 = vpop.f32.mrb[0].mxu0
  %v1826 = vadd.f32 %v1605, %v1825
  %v1827 = vpop.f32.mrb[0].mxu0
  %1828 = vmatprep.mubr.f32.mxu0 0.0
  %v1829 = vand.u32 %v1462, 4294901760
  %1830 = vmatmul.mubr.f32.gmra.mrb[0].mxu0 %v1829
  %v1831 = vpop.f32.mrb[0].mxu0
  %v1832 = vadd.f32 %v1615, %v1831
  %v1833 = vpop.f32.mrb[0].mxu0
  %1834 = vmatprep.mubr.f32.mxu0 0.0
  %v1835 = vand.u32 %v1463, 4294901760
  %1836 = vmatmul.mubr.f32.gmra.mrb[0].mxu0 %v1835
  %v1837 = vpop.f32.mrb[0].mxu0
  %v1838 = vadd.f32 %v1625, %v1837
  %v1839 = vpop.f32.mrb[0].mxu0
  %1840 = vmatprep.mubr.f32.mxu0 0.0
  %v1841 = vand.u32 %v1464, 4294901760
  %1842 = vmatmul.mubr.f32.gmra.mrb[0].mxu0 %v1841
  %v1843 = vpop.f32.mrb[0].mxu0
  %v1844 = vadd.f32 %v1635, %v1843
  %v1845 = vpop.f32.mrb[0].mxu0
  %1846 = vmatprep.mubr.f32.mxu0 0.0
  %v1847 = vand.u32 %v1465, 4294901760
  %1848 = vmatmul.mubr.f32.gmra.mrb[0].mxu0 %v1847
  %v1849 = vpop.f32.mrb[0].mxu0
  %v1850 = vadd.f32 %v1645, %v1849
  %v1851 = vpop.f32.mrb[0].mxu0
  %1852 = vmatprep.mubr.f32.mxu0 0.0
  %v1853 = vand.u32 %v1466, 4294901760
  %1854 = vmatmul.mubr.f32.gmra.mrb[0].mxu0 %v1853
  %v1855 = vpop.f32.mrb[0].mxu0
  %v1856 = vadd.f32 %v1655, %v1855
  %v1857 = vpop.f32.mrb[0].mxu0
  %1858 = vmatprep.mubr.f32.mxu0 0.0
  %v1859 = vand.u32 %v1467, 4294901760
  %1860 = vmatmul.mubr.f32.gmra.mrb[0].mxu0 %v1859
  %v1861 = vpop.f32.mrb[0].mxu0
  %v1862 = vadd.f32 %v1665, %v1861
  %v1863 = vpop.f32.mrb[0].mxu0
  %1864 = vmatprep.mubr.f32.mxu0 0.0
  %v1865 = vand.u32 %v1468, 4294901760
  %1866 = vmatmul.mubr.f32.gmra.mrb[0].mxu0 %v1865
  %v1867 = vpop.f32.mrb[0].mxu0
  %v1868 = vadd.f32 %v1675, %v1867
  %v1869 = vpop.f32.mrb[0].mxu0
  %1870 = vdwg.mxu0
  %1871 = vmatprep.subr.mxu0 0.0
  %v1872 = vand.u32 %v1445, 4294901760
  %v1873 = vsub.f32 %v1445, %v1872
  %1874 = vmatpush1.msra.mxu0 %v1873
  %1875 = vmatprep.subr.mxu0 0.0
  %v1876 = vand.u32 %v1446, 4294901760
  %v1877 = vsub.f32 %v1446, %v1876
  %1878 = vmatpush1.msra.mxu0 %v1877
  %1879 = vmatprep.subr.mxu0 0.0
  %v1880 = vand.u32 %v1447, 4294901760
  %v1881 = vsub.f32 %v1447, %v1880
  %1882 = vmatpush1.msra.mxu0 %v1881
  %1883 = vmatprep.subr.mxu0 0.0
  %v1884 = vand.u32 %v1448, 4294901760
  %v1885 = vsub.f32 %v1448, %v1884
  %1886 = vmatpush1.msra.mxu0 %v1885
  %1887 = vmatprep.subr.mxu0 0.0
  %v1888 = vand.u32 %v1449, 4294901760
  %v1889 = vsub.f32 %v1449, %v1888
  %1890 = vmatpush1.msra.mxu0 %v1889
  %1891 = vmatprep.subr.mxu0 0.0
  %v1892 = vand.u32 %v1450, 4294901760
  %v1893 = vsub.f32 %v1450, %v1892
  %1894 = vmatpush1.msra.mxu0 %v1893
  %1895 = vmatprep.subr.mxu0 0.0
  %v1896 = vand.u32 %v1451, 4294901760
  %v1897 = vsub.f32 %v1451, %v1896
  %1898 = vmatpush1.msra.mxu0 %v1897
  %1899 = vmatprep.subr.mxu0 0.0
  %v1900 = vand.u32 %v1452, 4294901760
  %v1901 = vsub.f32 %v1452, %v1900
  %1902 = vmatpush1.msra.mxu0 %v1901
  %1903 = vmatprep.subr.mxu0 0.0
  %v1904 = vand.u32 %v1453, 4294901760
  %v1905 = vsub.f32 %v1453, %v1904
  %1906 = vmatpush1.msra.mxu0 %v1905
  %1907 = vmatprep.subr.mxu0 0.0
  %v1908 = vand.u32 %v1454, 4294901760
  %v1909 = vsub.f32 %v1454, %v1908
  %1910 = vmatpush1.msra.mxu0 %v1909
  %1911 = vmatprep.subr.mxu0 0.0
  %v1912 = vand.u32 %v1455, 4294901760
  %v1913 = vsub.f32 %v1455, %v1912
  %1914 = vmatpush1.msra.mxu0 %v1913
  %1915 = vmatprep.subr.mxu0 0.0
  %v1916 = vand.u32 %v1456, 4294901760
  %v1917 = vsub.f32 %v1456, %v1916
  %1918 = vmatpush1.msra.mxu0 %v1917
  %1919 = vmatprep.subr.mxu0 0.0
  %v1920 = vand.u32 %v1457, 4294901760
  %v1921 = vsub.f32 %v1457, %v1920
  %1922 = vmatpush1.msra.mxu0 %v1921
  %1923 = vmatprep.subr.mxu0 0.0
  %v1924 = vand.u32 %v1458, 4294901760
  %v1925 = vsub.f32 %v1458, %v1924
  %1926 = vmatpush1.msra.mxu0 %v1925
  %1927 = vmatprep.subr.mxu0 0.0
  %v1928 = vand.u32 %v1459, 4294901760
  %v1929 = vsub.f32 %v1459, %v1928
  %1930 = vmatpush1.msra.mxu0 %v1929
  %1931 = vmatprep.subr.mxu0 0.0
  %v1932 = vand.u32 %v1460, 4294901760
  %v1933 = vsub.f32 %v1460, %v1932
  %1934 = vmatpush1.msra.mxu0 %v1933
  %1935 = vmatprep.subr.mxu0 0.0
  %1936 = vmatpush1.msra.mxu0 0.0
  %1937 = vmatprep.subr.mxu0 0.0
  %1938 = vmatpush1.msra.mxu0 0.0
  %1939 = vmatprep.subr.mxu0 0.0
  %1940 = vmatpush1.msra.mxu0 0.0
  %1941 = vmatprep.subr.mxu0 0.0
  %1942 = vmatpush1.msra.mxu0 0.0
  %1943 = vmatprep.subr.mxu0 0.0
  %1944 = vmatpush1.msra.mxu0 0.0
  %1945 = vmatprep.subr.mxu0 0.0
  %1946 = vmatpush1.msra.mxu0 0.0
  %1947 = vmatprep.subr.mxu0 0.0
  %1948 = vmatpush1.msra.mxu0 0.0
  %1949 = vmatprep.subr.mxu0 0.0
  %1950 = vmatpush1.msra.mxu0 0.0
  %1951 = vmatprep.subr.mxu0 0.0
  %1952 = vmatpush1.msra.mxu0 0.0
  %1953 = vmatprep.subr.mxu0 0.0
  %1954 = vmatpush1.msra.mxu0 0.0
  %1955 = vmatprep.subr.mxu0 0.0
  %1956 = vmatpush1.msra.mxu0 0.0
  %1957 = vmatprep.subr.mxu0 0.0
  %1958 = vmatpush1.msra.mxu0 0.0
  %1959 = vmatprep.subr.mxu0 0.0
  %1960 = vmatpush1.msra.mxu0 0.0
  %1961 = vmatprep.subr.mxu0 0.0
  %1962 = vmatpush1.msra.mxu0 0.0
  %1963 = vmatprep.subr.mxu0 0.0
  %1964 = vmatpush1.msra.mxu0 0.0
  %1965 = vmatprep.subr.mxu0 0.0
  %1966 = vmatpush1.msra.mxu0 0.0
  %1967 = vmatprep.mubr.f32.mxu0 0.0
  %v1968 = vand.u32 %v1461, 4294901760
  %v1969 = vsub.f32 %v1461, %v1968
  %1970 = vmatmul.mubr.f32.gmra.mrb[0].mxu0 %v1969
  %v1971 = vpop.f32.mrb[0].mxu0
  %v1972 = vadd.f32 %v1826, %v1971
  %v1973 = vpop.f32.mrb[0].mxu0
  %1974 = vmatprep.mubr.f32.mxu0 0.0
  %v1975 = vand.u32 %v1462, 4294901760
  %v1976 = vsub.f32 %v1462, %v1975
  %1977 = vmatmul.mubr.f32.gmra.mrb[0].mxu0 %v1976
  %v1978 = vpop.f32.mrb[0].mxu0
  %v1979 = vadd.f32 %v1832, %v1978
  %v1980 = vpop.f32.mrb[0].mxu0
  %1981 = vmatprep.mubr.f32.mxu0 0.0
  %v1982 = vand.u32 %v1463, 4294901760
  %v1983 = vsub.f32 %v1463, %v1982
  %1984 = vmatmul.mubr.f32.gmra.mrb[0].mxu0 %v1983
  %v1985 = vpop.f32.mrb[0].mxu0
  %v1986 = vadd.f32 %v1838, %v1985
  %v1987 = vpop.f32.mrb[0].mxu0
  %1988 = vmatprep.mubr.f32.mxu0 0.0
  %v1989 = vand.u32 %v1464, 4294901760
  %v1990 = vsub.f32 %v1464, %v1989
  %1991 = vmatmul.mubr.f32.gmra.mrb[0].mxu0 %v1990
  %v1992 = vpop.f32.mrb[0].mxu0
  %v1993 = vadd.f32 %v1844, %v1992
  %v1994 = vpop.f32.mrb[0].mxu0
  %1995 = vmatprep.mubr.f32.mxu0 0.0
  %v1996 = vand.u32 %v1465, 4294901760
  %v1997 = vsub.f32 %v1465, %v1996
  %1998 = vmatmul.mubr.f32.gmra.mrb[0].mxu0 %v1997
  %v1999 = vpop.f32.mrb[0].mxu0
  %v2000 = vadd.f32 %v1850, %v1999
  %v2001 = vpop.f32.mrb[0].mxu0
  %2002 = vmatprep.mubr.f32.mxu0 0.0
  %v2003 = vand.u32 %v1466, 4294901760
  %v2004 = vsub.f32 %v1466, %v2003
  %2005 = vmatmul.mubr.f32.gmra.mrb[0].mxu0 %v2004
  %v2006 = vpop.f32.mrb[0].mxu0
  %v2007 = vadd.f32 %v1856, %v2006
  %v2008 = vpop.f32.mrb[0].mxu0
  %2009 = vmatprep.mubr.f32.mxu0 0.0
  %v2010 = vand.u32 %v1467, 4294901760
  %v2011 = vsub.f32 %v1467, %v2010
  %2012 = vmatmul.mubr.f32.gmra.mrb[0].mxu0 %v2011
  %v2013 = vpop.f32.mrb[0].mxu0
  %v2014 = vadd.f32 %v1862, %v2013
  %v2015 = vpop.f32.mrb[0].mxu0
  %2016 = vmatprep.mubr.f32.mxu0 0.0
  %v2017 = vand.u32 %v1468, 4294901760
  %v2018 = vsub.f32 %v1468, %v2017
  %2019 = vmatmul.mubr.f32.gmra.mrb[0].mxu0 %v2018
  %v2020 = vpop.f32.mrb[0].mxu0
  %v2021 = vadd.f32 %v1868, %v2020
  %v2022 = vpop.f32.mrb[0].mxu0
  %2023 = vdwg.mxu0
  %2024 = vmatprep.subr.mxu0 0.0
  %v2025 = vand.u32 %v1445, 4294901760
  %2026 = vmatpush1.msra.mxu0 %v2025
  %2027 = vmatprep.subr.mxu0 0.0
  %v2028 = vand.u32 %v1446, 4294901760
  %2029 = vmatpush1.msra.mxu0 %v2028
  %2030 = vmatprep.subr.mxu0 0.0
  %v2031 = vand.u32 %v1447, 4294901760
  %2032 = vmatpush1.msra.mxu0 %v2031
  %2033 = vmatprep.subr.mxu0 0.0
  %v2034 = vand.u32 %v1448, 4294901760
  %2035 = vmatpush1.msra.mxu0 %v2034
  %2036 = vmatprep.subr.mxu0 0.0
  %v2037 = vand.u32 %v1449, 4294901760
  %2038 = vmatpush1.msra.mxu0 %v2037
  %2039 = vmatprep.subr.mxu0 0.0
  %v2040 = vand.u32 %v1450, 4294901760
  %2041 = vmatpush1.msra.mxu0 %v2040
  %2042 = vmatprep.subr.mxu0 0.0
  %v2043 = vand.u32 %v1451, 4294901760
  %2044 = vmatpush1.msra.mxu0 %v2043
  %2045 = vmatprep.subr.mxu0 0.0
  %v2046 = vand.u32 %v1452, 4294901760
  %2047 = vmatpush1.msra.mxu0 %v2046
  %2048 = vmatprep.subr.mxu0 0.0
  %v2049 = vand.u32 %v1453, 4294901760
  %2050 = vmatpush1.msra.mxu0 %v2049
  %2051 = vmatprep.subr.mxu0 0.0
  %v2052 = vand.u32 %v1454, 4294901760
  %2053 = vmatpush1.msra.mxu0 %v2052
  %2054 = vmatprep.subr.mxu0 0.0
  %v2055 = vand.u32 %v1455, 4294901760
  %2056 = vmatpush1.msra.mxu0 %v2055
  %2057 = vmatprep.subr.mxu0 0.0
  %v2058 = vand.u32 %v1456, 4294901760
  %2059 = vmatpush1.msra.mxu0 %v2058
  %2060 = vmatprep.subr.mxu0 0.0
  %v2061 = vand.u32 %v1457, 4294901760
  %2062 = vmatpush1.msra.mxu0 %v2061
  %2063 = vmatprep.subr.mxu0 0.0
  %v2064 = vand.u32 %v1458, 4294901760
  %2065 = vmatpush1.msra.mxu0 %v2064
  %2066 = vmatprep.subr.mxu0 0.0
  %v2067 = vand.u32 %v1459, 4294901760
  %2068 = vmatpush1.msra.mxu0 %v2067
  %2069 = vmatprep.subr.mxu0 0.0
  %v2070 = vand.u32 %v1460, 4294901760
  %2071 = vmatpush1.msra.mxu0 %v2070
  %2072 = vmatprep.subr.mxu0 0.0
  %2073 = vmatpush1.msra.mxu0 0.0
  %2074 = vmatprep.subr.mxu0 0.0
  %2075 = vmatpush1.msra.mxu0 0.0
  %2076 = vmatprep.subr.mxu0 0.0
  %2077 = vmatpush1.msra.mxu0 0.0
  %2078 = vmatprep.subr.mxu0 0.0
  %2079 = vmatpush1.msra.mxu0 0.0
  %2080 = vmatprep.subr.mxu0 0.0
  %2081 = vmatpush1.msra.mxu0 0.0
  %2082 = vmatprep.subr.mxu0 0.0
  %2083 = vmatpush1.msra.mxu0 0.0
  %2084 = vmatprep.subr.mxu0 0.0
  %2085 = vmatpush1.msra.mxu0 0.0
  %2086 = vmatprep.subr.mxu0 0.0
  %2087 = vmatpush1.msra.mxu0 0.0
  %2088 = vmatprep.subr.mxu0 0.0
  %2089 = vmatpush1.msra.mxu0 0.0
  %2090 = vmatprep.subr.mxu0 0.0
  %2091 = vmatpush1.msra.mxu0 0.0
  %2092 = vmatprep.subr.mxu0 0.0
  %2093 = vmatpush1.msra.mxu0 0.0
  %2094 = vmatprep.subr.mxu0 0.0
  %2095 = vmatpush1.msra.mxu0 0.0
  %2096 = vmatprep.subr.mxu0 0.0
  %2097 = vmatpush1.msra.mxu0 0.0
  %2098 = vmatprep.subr.mxu0 0.0
  %2099 = vmatpush1.msra.mxu0 0.0
  %2100 = vmatprep.subr.mxu0 0.0
  %2101 = vmatpush1.msra.mxu0 0.0
  %2102 = vmatprep.subr.mxu0 0.0
  %2103 = vmatpush1.msra.mxu0 0.0
  %2104 = vmatprep.mubr.f32.mxu0 0.0
  %v2105 = vand.u32 %v1461, 4294901760
  %v2106 = vsub.f32 %v1461, %v2105
  %v2107 = vand.u32 %v2106, 4294901760
  %2108 = vmatmul.mubr.f32.gmra.mrb[0].mxu0 %v2107
  %v2109 = vpop.f32.mrb[0].mxu0
  %v2110 = vadd.f32 %v1972, %v2109
  %v2111 = vpop.f32.mrb[0].mxu0
  %2112 = vmatprep.mubr.f32.mxu0 0.0
  %v2113 = vand.u32 %v1462, 4294901760
  %v2114 = vsub.f32 %v1462, %v2113
  %v2115 = vand.u32 %v2114, 4294901760
  %2116 = vmatmul.mubr.f32.gmra.mrb[0].mxu0 %v2115
  %v2117 = vpop.f32.mrb[0].mxu0
  %v2118 = vadd.f32 %v1979, %v2117
  %v2119 = vpop.f32.mrb[0].mxu0
  %2120 = vmatprep.mubr.f32.mxu0 0.0
  %v2121 = vand.u32 %v1463, 4294901760
  %v2122 = vsub.f32 %v1463, %v2121
  %v2123 = vand.u32 %v2122, 4294901760
  %2124 = vmatmul.mubr.f32.gmra.mrb[0].mxu0 %v2123
  %v2125 = vpop.f32.mrb[0].mxu0
  %v2126 = vadd.f32 %v1986, %v2125
  %v2127 = vpop.f32.mrb[0].mxu0
  %2128 = vmatprep.mubr.f32.mxu0 0.0
  %v2129 = vand.u32 %v1464, 4294901760
  %v2130 = vsub.f32 %v1464, %v2129
  %v2131 = vand.u32 %v2130, 4294901760
  %2132 = vmatmul.mubr.f32.gmra.mrb[0].mxu0 %v2131
  %v2133 = vpop.f32.mrb[0].mxu0
  %v2134 = vadd.f32 %v1993, %v2133
  %v2135 = vpop.f32.mrb[0].mxu0
  %2136 = vmatprep.mubr.f32.mxu0 0.0
  %v2137 = vand.u32 %v1465, 4294901760
  %v2138 = vsub.f32 %v1465, %v2137
  %v2139 = vand.u32 %v2138, 4294901760
  %2140 = vmatmul.mubr.f32.gmra.mrb[0].mxu0 %v2139
  %v2141 = vpop.f32.mrb[0].mxu0
  %v2142 = vadd.f32 %v2000, %v2141
  %v2143 = vpop.f32.mrb[0].mxu0
  %2144 = vmatprep.mubr.f32.mxu0 0.0
  %v2145 = vand.u32 %v1466, 4294901760
  %v2146 = vsub.f32 %v1466, %v2145
  %v2147 = vand.u32 %v2146, 4294901760
  %2148 = vmatmul.mubr.f32.gmra.mrb[0].mxu0 %v2147
  %v2149 = vpop.f32.mrb[0].mxu0
  %v2150 = vadd.f32 %v2007, %v2149
  %v2151 = vpop.f32.mrb[0].mxu0
  %2152 = vmatprep.mubr.f32.mxu0 0.0
  %v2153 = vand.u32 %v1467, 4294901760
  %v2154 = vsub.f32 %v1467, %v2153
  %v2155 = vand.u32 %v2154, 4294901760
  %2156 = vmatmul.mubr.f32.gmra.mrb[0].mxu0 %v2155
  %v2157 = vpop.f32.mrb[0].mxu0
  %v2158 = vadd.f32 %v2014, %v2157
  %v2159 = vpop.f32.mrb[0].mxu0
  %2160 = vmatprep.mubr.f32.mxu0 0.0
  %v2161 = vand.u32 %v1468, 4294901760
  %v2162 = vsub.f32 %v1468, %v2161
  %v2163 = vand.u32 %v2162, 4294901760
  %2164 = vmatmul.mubr.f32.gmra.mrb[0].mxu0 %v2163
  %v2165 = vpop.f32.mrb[0].mxu0
  %v2166 = vadd.f32 %v2021, %v2165
  %v2167 = vpop.f32.mrb[0].mxu0
  %2168 = vdwg.mxu0
  %2169 = vmatprep.subr.mxu0 0.0
  %v2170 = vand.u32 %v1445, 4294901760
  %v2171 = vsub.f32 %v1445, %v2170
  %v2172 = vand.u32 %v2171, 4294901760
  %2173 = vmatpush1.msra.mxu0 %v2172
  %2174 = vmatprep.subr.mxu0 0.0
  %v2175 = vand.u32 %v1446, 4294901760
  %v2176 = vsub.f32 %v1446, %v2175
  %v2177 = vand.u32 %v2176, 4294901760
  %2178 = vmatpush1.msra.mxu0 %v2177
  %2179 = vmatprep.subr.mxu0 0.0
  %v2180 = vand.u32 %v1447, 4294901760
  %v2181 = vsub.f32 %v1447, %v2180
  %v2182 = vand.u32 %v2181, 4294901760
  %2183 = vmatpush1.msra.mxu0 %v2182
  %2184 = vmatprep.subr.mxu0 0.0
  %v2185 = vand.u32 %v1448, 4294901760
  %v2186 = vsub.f32 %v1448, %v2185
  %v2187 = vand.u32 %v2186, 4294901760
  %2188 = vmatpush1.msra.mxu0 %v2187
  %2189 = vmatprep.subr.mxu0 0.0
  %v2190 = vand.u32 %v1449, 4294901760
  %v2191 = vsub.f32 %v1449, %v2190
  %v2192 = vand.u32 %v2191, 4294901760
  %2193 = vmatpush1.msra.mxu0 %v2192
  %2194 = vmatprep.subr.mxu0 0.0
  %v2195 = vand.u32 %v1450, 4294901760
  %v2196 = vsub.f32 %v1450, %v2195
  %v2197 = vand.u32 %v2196, 4294901760
  %2198 = vmatpush1.msra.mxu0 %v2197
  %2199 = vmatprep.subr.mxu0 0.0
  %v2200 = vand.u32 %v1451, 4294901760
  %v2201 = vsub.f32 %v1451, %v2200
  %v2202 = vand.u32 %v2201, 4294901760
  %2203 = vmatpush1.msra.mxu0 %v2202
  %2204 = vmatprep.subr.mxu0 0.0
  %v2205 = vand.u32 %v1452, 4294901760
  %v2206 = vsub.f32 %v1452, %v2205
  %v2207 = vand.u32 %v2206, 4294901760
  %2208 = vmatpush1.msra.mxu0 %v2207
  %2209 = vmatprep.subr.mxu0 0.0
  %v2210 = vand.u32 %v1453, 4294901760
  %v2211 = vsub.f32 %v1453, %v2210
  %v2212 = vand.u32 %v2211, 4294901760
  %2213 = vmatpush1.msra.mxu0 %v2212
  %2214 = vmatprep.subr.mxu0 0.0
  %v2215 = vand.u32 %v1454, 4294901760
  %v2216 = vsub.f32 %v1454, %v2215
  %v2217 = vand.u32 %v2216, 4294901760
  %2218 = vmatpush1.msra.mxu0 %v2217
  %2219 = vmatprep.subr.mxu0 0.0
  %v2220 = vand.u32 %v1455, 4294901760
  %v2221 = vsub.f32 %v1455, %v2220
  %v2222 = vand.u32 %v2221, 4294901760
  %2223 = vmatpush1.msra.mxu0 %v2222
  %2224 = vmatprep.subr.mxu0 0.0
  %v2225 = vand.u32 %v1456, 4294901760
  %v2226 = vsub.f32 %v1456, %v2225
  %v2227 = vand.u32 %v2226, 4294901760
  %2228 = vmatpush1.msra.mxu0 %v2227
  %2229 = vmatprep.subr.mxu0 0.0
  %v2230 = vand.u32 %v1457, 4294901760
  %v2231 = vsub.f32 %v1457, %v2230
  %v2232 = vand.u32 %v2231, 4294901760
  %2233 = vmatpush1.msra.mxu0 %v2232
  %2234 = vmatprep.subr.mxu0 0.0
  %v2235 = vand.u32 %v1458, 4294901760
  %v2236 = vsub.f32 %v1458, %v2235
  %v2237 = vand.u32 %v2236, 4294901760
  %2238 = vmatpush1.msra.mxu0 %v2237
  %2239 = vmatprep.subr.mxu0 0.0
  %v2240 = vand.u32 %v1459, 4294901760
  %v2241 = vsub.f32 %v1459, %v2240
  %v2242 = vand.u32 %v2241, 4294901760
  %2243 = vmatpush1.msra.mxu0 %v2242
  %2244 = vmatprep.subr.mxu0 0.0
  %v2245 = vand.u32 %v1460, 4294901760
  %v2246 = vsub.f32 %v1460, %v2245
  %v2247 = vand.u32 %v2246, 4294901760
  %2248 = vmatpush1.msra.mxu0 %v2247
  %2249 = vmatprep.subr.mxu0 0.0
  %2250 = vmatpush1.msra.mxu0 0.0
  %2251 = vmatprep.subr.mxu0 0.0
  %2252 = vmatpush1.msra.mxu0 0.0
  %2253 = vmatprep.subr.mxu0 0.0
  %2254 = vmatpush1.msra.mxu0 0.0
  %2255 = vmatprep.subr.mxu0 0.0
  %2256 = vmatpush1.msra.mxu0 0.0
  %2257 = vmatprep.subr.mxu0 0.0
  %2258 = vmatpush1.msra.mxu0 0.0
  %2259 = vmatprep.subr.mxu0 0.0
  %2260 = vmatpush1.msra.mxu0 0.0
  %2261 = vmatprep.subr.mxu0 0.0
  %2262 = vmatpush1.msra.mxu0 0.0
  %2263 = vmatprep.subr.mxu0 0.0
  %2264 = vmatpush1.msra.mxu0 0.0
  %2265 = vmatprep.subr.mxu0 0.0
  %2266 = vmatpush1.msra.mxu0 0.0
  %2267 = vmatprep.subr.mxu0 0.0
  %2268 = vmatpush1.msra.mxu0 0.0
  %2269 = vmatprep.subr.mxu0 0.0
  %2270 = vmatpush1.msra.mxu0 0.0
  %2271 = vmatprep.subr.mxu0 0.0
  %2272 = vmatpush1.msra.mxu0 0.0
  %2273 = vmatprep.subr.mxu0 0.0
  %2274 = vmatpush1.msra.mxu0 0.0
  %2275 = vmatprep.subr.mxu0 0.0
  %2276 = vmatpush1.msra.mxu0 0.0
  %2277 = vmatprep.subr.mxu0 0.0
  %2278 = vmatpush1.msra.mxu0 0.0
  %2279 = vmatprep.subr.mxu0 0.0
  %2280 = vmatpush1.msra.mxu0 0.0
  %2281 = vmatprep.mubr.f32.mxu0 0.0
  %v2282 = vand.u32 %v1461, 4294901760
  %2283 = vmatmul.mubr.f32.gmra.mrb[0].mxu0 %v2282
  %v2284 = vpop.f32.mrb[0].mxu0
  %v2285 = vadd.f32 %v2110, %v2284
  %v2286 = vpop.f32.mrb[0].mxu0
  %2287 = vmatprep.mubr.f32.mxu0 0.0
  %v2288 = vand.u32 %v1462, 4294901760
  %2289 = vmatmul.mubr.f32.gmra.mrb[0].mxu0 %v2288
  %v2290 = vpop.f32.mrb[0].mxu0
  %v2291 = vadd.f32 %v2118, %v2290
  %v2292 = vpop.f32.mrb[0].mxu0
  %2293 = vmatprep.mubr.f32.mxu0 0.0
  %v2294 = vand.u32 %v1463, 4294901760
  %2295 = vmatmul.mubr.f32.gmra.mrb[0].mxu0 %v2294
  %v2296 = vpop.f32.mrb[0].mxu0
  %v2297 = vadd.f32 %v2126, %v2296
  %v2298 = vpop.f32.mrb[0].mxu0
  %2299 = vmatprep.mubr.f32.mxu0 0.0
  %v2300 = vand.u32 %v1464, 4294901760
  %2301 = vmatmul.mubr.f32.gmra.mrb[0].mxu0 %v2300
  %v2302 = vpop.f32.mrb[0].mxu0
  %v2303 = vadd.f32 %v2134, %v2302
  %v2304 = vpop.f32.mrb[0].mxu0
  %2305 = vmatprep.mubr.f32.mxu0 0.0
  %v2306 = vand.u32 %v1465, 4294901760
  %2307 = vmatmul.mubr.f32.gmra.mrb[0].mxu0 %v2306
  %v2308 = vpop.f32.mrb[0].mxu0
  %v2309 = vadd.f32 %v2142, %v2308
  %v2310 = vpop.f32.mrb[0].mxu0
  %2311 = vmatprep.mubr.f32.mxu0 0.0
  %v2312 = vand.u32 %v1466, 4294901760
  %2313 = vmatmul.mubr.f32.gmra.mrb[0].mxu0 %v2312
  %v2314 = vpop.f32.mrb[0].mxu0
  %v2315 = vadd.f32 %v2150, %v2314
  %v2316 = vpop.f32.mrb[0].mxu0
  %2317 = vmatprep.mubr.f32.mxu0 0.0
  %v2318 = vand.u32 %v1467, 4294901760
  %2319 = vmatmul.mubr.f32.gmra.mrb[0].mxu0 %v2318
  %v2320 = vpop.f32.mrb[0].mxu0
  %v2321 = vadd.f32 %v2158, %v2320
  %v2322 = vpop.f32.mrb[0].mxu0
  %2323 = vmatprep.mubr.f32.mxu0 0.0
  %v2324 = vand.u32 %v1468, 4294901760
  %2325 = vmatmul.mubr.f32.gmra.mrb[0].mxu0 %v2324
  %v2326 = vpop.f32.mrb[0].mxu0
  %v2327 = vadd.f32 %v2166, %v2326
  %v2328 = vpop.f32.mrb[0].mxu0
  %2329 = vdwg.mxu0
  %2330 = vmatprep.subr.mxu0 0.0
  %v2331 = vand.u32 %v1445, 4294901760
  %2332 = vmatpush1.msra.mxu0 %v2331
  %2333 = vmatprep.subr.mxu0 0.0
  %v2334 = vand.u32 %v1446, 4294901760
  %2335 = vmatpush1.msra.mxu0 %v2334
  %2336 = vmatprep.subr.mxu0 0.0
  %v2337 = vand.u32 %v1447, 4294901760
  %2338 = vmatpush1.msra.mxu0 %v2337
  %2339 = vmatprep.subr.mxu0 0.0
  %v2340 = vand.u32 %v1448, 4294901760
  %2341 = vmatpush1.msra.mxu0 %v2340
  %2342 = vmatprep.subr.mxu0 0.0
  %v2343 = vand.u32 %v1449, 4294901760
  %2344 = vmatpush1.msra.mxu0 %v2343
  %2345 = vmatprep.subr.mxu0 0.0
  %v2346 = vand.u32 %v1450, 4294901760
  %2347 = vmatpush1.msra.mxu0 %v2346
  %2348 = vmatprep.subr.mxu0 0.0
  %v2349 = vand.u32 %v1451, 4294901760
  %2350 = vmatpush1.msra.mxu0 %v2349
  %2351 = vmatprep.subr.mxu0 0.0
  %v2352 = vand.u32 %v1452, 4294901760
  %2353 = vmatpush1.msra.mxu0 %v2352
  %2354 = vmatprep.subr.mxu0 0.0
  %v2355 = vand.u32 %v1453, 4294901760
  %2356 = vmatpush1.msra.mxu0 %v2355
  %2357 = vmatprep.subr.mxu0 0.0
  %v2358 = vand.u32 %v1454, 4294901760
  %2359 = vmatpush1.msra.mxu0 %v2358
  %2360 = vmatprep.subr.mxu0 0.0
  %v2361 = vand.u32 %v1455, 4294901760
  %2362 = vmatpush1.msra.mxu0 %v2361
  %2363 = vmatprep.subr.mxu0 0.0
  %v2364 = vand.u32 %v1456, 4294901760
  %2365 = vmatpush1.msra.mxu0 %v2364
  %2366 = vmatprep.subr.mxu0 0.0
  %v2367 = vand.u32 %v1457, 4294901760
  %2368 = vmatpush1.msra.mxu0 %v2367
  %2369 = vmatprep.subr.mxu0 0.0
  %v2370 = vand.u32 %v1458, 4294901760
  %2371 = vmatpush1.msra.mxu0 %v2370
  %2372 = vmatprep.subr.mxu0 0.0
  %v2373 = vand.u32 %v1459, 4294901760
  %2374 = vmatpush1.msra.mxu0 %v2373
  %2375 = vmatprep.subr.mxu0 0.0
  %v2376 = vand.u32 %v1460, 4294901760
  %2377 = vmatpush1.msra.mxu0 %v2376
  %2378 = vmatprep.subr.mxu0 0.0
  %2379 = vmatpush1.msra.mxu0 0.0
  %2380 = vmatprep.subr.mxu0 0.0
  %2381 = vmatpush1.msra.mxu0 0.0
  %2382 = vmatprep.subr.mxu0 0.0
  %2383 = vmatpush1.msra.mxu0 0.0
  %2384 = vmatprep.subr.mxu0 0.0
  %2385 = vmatpush1.msra.mxu0 0.0
  %2386 = vmatprep.subr.mxu0 0.0
  %2387 = vmatpush1.msra.mxu0 0.0
  %2388 = vmatprep.subr.mxu0 0.0
  %2389 = vmatpush1.msra.mxu0 0.0
  %2390 = vmatprep.subr.mxu0 0.0
  %2391 = vmatpush1.msra.mxu0 0.0
  %2392 = vmatprep.subr.mxu0 0.0
  %2393 = vmatpush1.msra.mxu0 0.0
  %2394 = vmatprep.subr.mxu0 0.0
  %2395 = vmatpush1.msra.mxu0 0.0
  %2396 = vmatprep.subr.mxu0 0.0
  %2397 = vmatpush1.msra.mxu0 0.0
  %2398 = vmatprep.subr.mxu0 0.0
  %2399 = vmatpush1.msra.mxu0 0.0
  %2400 = vmatprep.subr.mxu0 0.0
  %2401 = vmatpush1.msra.mxu0 0.0
  %2402 = vmatprep.subr.mxu0 0.0
  %2403 = vmatpush1.msra.mxu0 0.0
  %2404 = vmatprep.subr.mxu0 0.0
  %2405 = vmatpush1.msra.mxu0 0.0
  %2406 = vmatprep.subr.mxu0 0.0
  %2407 = vmatpush1.msra.mxu0 0.0
  %2408 = vmatprep.subr.mxu0 0.0
  %2409 = vmatpush1.msra.mxu0 0.0
  %2410 = vmatprep.mubr.f32.mxu0 0.0
  %v2411 = vand.u32 %v1461, 4294901760
  %2412 = vmatmul.mubr.f32.gmra.mrb[0].mxu0 %v2411
  %v2413 = vpop.f32.mrb[0].mxu0
  %v2414 = vadd.f32 %v2285, %v2413
  %v2415 = vpop.f32.mrb[0].mxu0
  %2416 = vmatprep.mubr.f32.mxu0 0.0
  %v2417 = vand.u32 %v1462, 4294901760
  %2418 = vmatmul.mubr.f32.gmra.mrb[0].mxu0 %v2417
  %v2419 = vpop.f32.mrb[0].mxu0
  %v2420 = vadd.f32 %v2291, %v2419
  %v2421 = vpop.f32.mrb[0].mxu0
  %2422 = vmatprep.mubr.f32.mxu0 0.0
  %v2423 = vand.u32 %v1463, 4294901760
  %2424 = vmatmul.mubr.f32.gmra.mrb[0].mxu0 %v2423
  %v2425 = vpop.f32.mrb[0].mxu0
  %v2426 = vadd.f32 %v2297, %v2425
  %v2427 = vpop.f32.mrb[0].mxu0
  %2428 = vmatprep.mubr.f32.mxu0 0.0
  %v2429 = vand.u32 %v1464, 4294901760
  %2430 = vmatmul.mubr.f32.gmra.mrb[0].mxu0 %v2429
  %v2431 = vpop.f32.mrb[0].mxu0
  %v2432 = vadd.f32 %v2303, %v2431
  %v2433 = vpop.f32.mrb[0].mxu0
  %2434 = vmatprep.mubr.f32.mxu0 0.0
  %v2435 = vand.u32 %v1465, 4294901760
  %2436 = vmatmul.mubr.f32.gmra.mrb[0].mxu0 %v2435
  %v2437 = vpop.f32.mrb[0].mxu0
  %v2438 = vadd.f32 %v2309, %v2437
  %v2439 = vpop.f32.mrb[0].mxu0
  %2440 = vmatprep.mubr.f32.mxu0 0.0
  %v2441 = vand.u32 %v1466, 4294901760
  %2442 = vmatmul.mubr.f32.gmra.mrb[0].mxu0 %v2441
  %v2443 = vpop.f32.mrb[0].mxu0
  %v2444 = vadd.f32 %v2315, %v2443
  %v2445 = vpop.f32.mrb[0].mxu0
  %2446 = vmatprep.mubr.f32.mxu0 0.0
  %v2447 = vand.u32 %v1467, 4294901760
  %2448 = vmatmul.mubr.f32.gmra.mrb[0].mxu0 %v2447
  %v2449 = vpop.f32.mrb[0].mxu0
  %v2450 = vadd.f32 %v2321, %v2449
  %v2451 = vpop.f32.mrb[0].mxu0
  %2452 = vmatprep.mubr.f32.mxu0 0.0
  %v2453 = vand.u32 %v1468, 4294901760
  %2454 = vmatmul.mubr.f32.gmra.mrb[0].mxu0 %v2453
  %v2455 = vpop.f32.mrb[0].mxu0
  %v2456 = vadd.f32 %v2327, %v2455
  %v2457 = vpop.f32.mrb[0].mxu0
  %2458 = vdwg.mxu0
  %v2459 = vsel %vm141, %v2414, 0.0
  %v2460 = vsel %vm141, %v2420, 0.0
  %v2461 = vadd.f32 %v2459, %v2460
  %v2462 = vsel %vm141, %v2426, 0.0
  %v2463 = vadd.f32 %v2461, %v2462
  %v2464 = vsel %vm141, %v2432, 0.0
  %v2465 = vadd.f32 %v2463, %v2464
  %v2466 = vsel %vm141, %v2438, 0.0
  %v2467 = vadd.f32 %v2465, %v2466
  %v2468 = vsel %vm141, %v2444, 0.0
  %v2469 = vadd.f32 %v2467, %v2468
  %v2470 = vsel %vm141, %v2450, 0.0
  %v2471 = vadd.f32 %v2469, %v2470
  %v2472 = vsel %vm141, %v2456, 0.0
  %v2473 = vadd.f32 %v2471, %v2472
  %v2474 = vrot.slane %v2473, 4
  %v2475 = vadd.f32 %v2473, %v2474
  %v2476 = vrot.slane %v2475, 2
  %v2477 = vadd.f32 %v2475, %v2476
  %v2478 = vrot.slane %v2477, 1
  %v2479 = vadd.f32 %v2477, %v2478
  %v2480 = vmul.f32 %v2479, 0.015625
  %v2481 = vmul.f32 %v2414, %v2414
  %v2482 = vmul.f32 %v2420, %v2420
  %v2483 = vmul.f32 %v2426, %v2426
  %v2484 = vmul.f32 %v2432, %v2432
  %v2485 = vmul.f32 %v2438, %v2438
  %v2486 = vmul.f32 %v2444, %v2444
  %v2487 = vmul.f32 %v2450, %v2450
  %v2488 = vmul.f32 %v2456, %v2456
  %v2489 = vsel %vm141, %v2481, 0.0
  %v2490 = vsel %vm141, %v2482, 0.0
  %v2491 = vadd.f32 %v2489, %v2490
  %v2492 = vsel %vm141, %v2483, 0.0
  %v2493 = vadd.f32 %v2491, %v2492
  %v2494 = vsel %vm141, %v2484, 0.0
  %v2495 = vadd.f32 %v2493, %v2494
  %v2496 = vsel %vm141, %v2485, 0.0
  %v2497 = vadd.f32 %v2495, %v2496
  %v2498 = vsel %vm141, %v2486, 0.0
  %v2499 = vadd.f32 %v2497, %v2498
  %v2500 = vsel %vm141, %v2487, 0.0
  %v2501 = vadd.f32 %v2499, %v2500
  %v2502 = vsel %vm141, %v2488, 0.0
  %v2503 = vadd.f32 %v2501, %v2502
  %v2504 = vrot.slane %v2503, 4
  %v2505 = vadd.f32 %v2503, %v2504
  %v2506 = vrot.slane %v2505, 2
  %v2507 = vadd.f32 %v2505, %v2506
  %v2508 = vrot.slane %v2507, 1
  %v2509 = vadd.f32 %v2507, %v2508
  %v2510 = vmul.f32 %v2509, 0.015625
  %v2511 = vmul.f32 %v2480, %v2480
  %v2512 = vsub.f32 %v2510, %v2511
  %v2513 = vmax.f32 %v2512, 0.0
  %v2514 = vsub.f32 %v2414, %v2480
  %v2515 = vsub.f32 %v2420, %v2480
  %v2516 = vsub.f32 %v2426, %v2480
  %v2517 = vsub.f32 %v2432, %v2480
  %v2518 = vsub.f32 %v2438, %v2480
  %v2519 = vsub.f32 %v2444, %v2480
  %v2520 = vsub.f32 %v2450, %v2480
  %v2521 = vsub.f32 %v2456, %v2480
  %v2522 = vadd.f32 %v2513, 1e-05
  %v2523 = vrsqrt.pop %v2522
  %v2524 = vmul.f32 %v2514, %v2523
  %v2525 = vmul.f32 %v2515, %v2523
  %v2526 = vmul.f32 %v2516, %v2523
  %v2527 = vmul.f32 %v2517, %v2523
  %v2528 = vmul.f32 %v2518, %v2523
  %v2529 = vmul.f32 %v2519, %v2523
  %v2530 = vmul.f32 %v2520, %v2523
  %v2531 = vmul.f32 %v2521, %v2523
  %v2532 = vmul.f32 %v2524, 0.2
  %v2533 = vmul.f32 %v2525, 0.2
  %v2534 = vmul.f32 %v2526, 0.2
  %v2535 = vmul.f32 %v2527, 0.2
  %v2536 = vmul.f32 %v2528, 0.2
  %v2537 = vmul.f32 %v2529, 0.2
  %v2538 = vmul.f32 %v2530, 0.2
  %v2539 = vmul.f32 %v2531, 0.2
  %v2540 = vmax.f32 %v2524, %v2532
  %v2541 = vmax.f32 %v2525, %v2533
  %v2542 = vmax.f32 %v2526, %v2534
  %v2543 = vmax.f32 %v2527, %v2535
  %v2544 = vmax.f32 %v2528, %v2536
  %v2545 = vmax.f32 %v2529, %v2537
  %v2546 = vmax.f32 %v2530, %v2538
  %v2547 = vmax.f32 %v2531, %v2539
  %v2548 = vld [vmem:[%s5] sm:$0xff]
  %v2549 = vld [vmem:[%s5 + $0x8] sm:$0xff]
  %v2550 = vld [vmem:[%s5 + $0x10] sm:$0xff]
  %v2551 = vld [vmem:[%s5 + $0x18] sm:$0xff]
  %v2552 = vld [vmem:[%s5 + $0x20] sm:$0xff]
  %v2553 = vld [vmem:[%s5 + $0x28] sm:$0xff]
  %v2554 = vld [vmem:[%s5 + $0x30] sm:$0xff]
  %v2555 = vld [vmem:[%s5 + $0x38] sm:$0xff]
  %2557 = vset.pattern.permute.xlu0 0
  %2558 = vperm.xlu0 %2557, %v2548
  %v2559 = vpop.permute.xlu0 %2558
  %2562 = vset.pattern.permute.xlu0 0
  %2563 = vperm.xlu0 %2562, %v2549
  %v2564 = vpop.permute.xlu0 %2563
  %2567 = vset.pattern.permute.xlu0 0
  %2568 = vperm.xlu0 %2567, %v2550
  %v2569 = vpop.permute.xlu0 %2568
  %2572 = vset.pattern.permute.xlu0 0
  %2573 = vperm.xlu0 %2572, %v2551
  %v2574 = vpop.permute.xlu0 %2573
  %2577 = vset.pattern.permute.xlu0 0
  %2578 = vperm.xlu0 %2577, %v2552
  %v2579 = vpop.permute.xlu0 %2578
  %2582 = vset.pattern.permute.xlu0 0
  %2583 = vperm.xlu0 %2582, %v2553
  %v2584 = vpop.permute.xlu0 %2583
  %2587 = vset.pattern.permute.xlu0 0
  %2588 = vperm.xlu0 %2587, %v2554
  %v2589 = vpop.permute.xlu0 %2588
  %2592 = vset.pattern.permute.xlu0 0
  %2593 = vperm.xlu0 %2592, %v2555
  %v2594 = vpop.permute.xlu0 %2593
  %v2596 = vmul.f32 %v2540, %v2559
  %v2597 = vmul.f32 %v2541, %v2564
  %v2598 = vmul.f32 %v2542, %v2569
  %v2599 = vmul.f32 %v2543, %v2574
  %v2600 = vmul.f32 %v2544, %v2579
  %v2601 = vmul.f32 %v2545, %v2584
  %v2602 = vmul.f32 %v2546, %v2589
  %v2603 = vmul.f32 %v2547, %v2594
  %v2604 = vsel %vm141, %v2596, 0.0
  %v2605 = vsel %vm141, %v2597, 0.0
  %v2606 = vadd.f32 %v2604, %v2605
  %v2607 = vsel %vm141, %v2598, 0.0
  %v2608 = vadd.f32 %v2606, %v2607
  %v2609 = vsel %vm141, %v2599, 0.0
  %v2610 = vadd.f32 %v2608, %v2609
  %v2611 = vsel %vm141, %v2600, 0.0
  %v2612 = vadd.f32 %v2610, %v2611
  %v2613 = vsel %vm141, %v2601, 0.0
  %v2614 = vadd.f32 %v2612, %v2613
  %v2615 = vsel %vm141, %v2602, 0.0
  %v2616 = vadd.f32 %v2614, %v2615
  %v2617 = vsel %vm141, %v2603, 0.0
  %v2618 = vadd.f32 %v2616, %v2617
  %v2619 = vrot.slane %v2618, 4
  %v2620 = vadd.f32 %v2618, %v2619
  %v2621 = vrot.slane %v2620, 2
  %v2622 = vadd.f32 %v2620, %v2621
  %v2623 = vrot.slane %v2622, 1
  %v2624 = vadd.f32 %v2622, %v2623
  %s2625 = sld [smem:[#allocation2]]
  %v2626 = vstv %s2625
  %v2627 = vadd.f32 %v2624, %v2626
  %v2628 = vxor.u32 %v2627, 2147483648
  %v2629 = vmul.f32 %v2628, 1.442695
  %v2630 = vpow.pop %v2629
  %v2631 = vadd.f32 %v2630, 1.0
  %v2632 = vrcp.pop %v2631
  %v2633 = vmul.f32 1.0, %v2632
  %vm2634 = vcmask 122880
  %2635 = vst.msk [vmem:[%s7] sm:$0x1] %vm2634, %v2633
  // Predicated region
  $region30: #{discriminator_forward.1} parent=0 // pred_check
    _
  $region31: #{discriminator_forward.1} parent=0 // pred_check_branch
    %2637 = sbr.rel (0) target = $region33
  $region32: #{discriminator_forward.1} parent=0 // pred_region
    _
  $region33: #{discriminator_forward.1} parent=0 // pred_fallthru
    _
  // Predicated region
  $region34: #{discriminator_forward.1} parent=0 // pred_check
    _
  $region35: #{discriminator_forward.1} parent=0 // pred_check_branch
    %2639 = sbr.rel (0) target = $region37
  $region36: #{discriminator_forward.1} parent=0 // pred_region
    _
  $region37: #{discriminator_forward.1} parent=0 // pred_fallthru
    _

</llo_original>
